<compile_context>
chip_gen: v5e
topology: v5e:2x2
jax: 0.10.0
libtpu: 0.0.40
codegen_flags: <defaults>
</compile_context>

<pallas_src>
import functools
import math

import jax
import jax.numpy as jnp
from jax import lax
from jax.experimental import pallas as pl
from jax.experimental.pallas import tpu as pltpu


def _bn_relu_conv_bn_kernel(x_ref, w_ref, p_ref, o_ref, im2col_ref, *, width, kw):
    # x_ref:      (BLK, C)     bf16  flattened (n,h,w) rows x channels
    # w_ref:      (kw*C, C)    bf16  conv taps (k-major, cin-minor), BN2 scale folded
    # p_ref:      (3, C)       f32   row0 = BN1 scale, row1 = BN1 shift, row2 = BN2 shift
    # o_ref:      (BLK, C)     f32   output
    # im2col_ref: (BLK, kw*C)  bf16  VMEM scratch holding the im2col slab
    blk, c = x_ref.shape
    pad = (kw - 1) // 2

    p = p_ref[...]
    s1 = p[0:1, :]
    b1 = p[1:2, :]
    b2 = p[2:3, :]

    # BN1 (folded) + ReLU in f32.
    y = jnp.maximum(x_ref[...].astype(jnp.float32) * s1 + b1, 0.0)

    # Position of each flattened row inside its W-row (blocks hold whole W-rows).
    w_idx = lax.broadcasted_iota(jnp.int32, (blk, 1), 0) % width

    # Build the im2col slab: tap k holds y shifted by d = k - pad along the
    # flattened row axis via an XLU roll; positions whose source crosses a
    # W-row boundary (including the roll's wrap-around rows, which always sit
    # at a W-row edge) are zeroed -> this IS the conv's zero padding along W.
    for k in range(kw):                      # kw is static -> unrolled
        d = k - pad
        if d == 0:
            piece = y
        else:
            rolled = pltpu.roll(y, shift=(-d) % blk, axis=0)
            if d > 0:
                mask = (w_idx + d) < width
            else:
                mask = (w_idx + d) >= 0
            piece = jnp.where(mask, rolled, 0.0)
        im2col_ref[:, k * c:(k + 1) * c] = piece.astype(im2col_ref.dtype)

    # Single MXU matmul with an 896-deep contraction (BN2 scale already folded
    # into the weights), f32 accumulation, then the BN2 shift.
    acc = jnp.dot(im2col_ref[...], w_ref[...],
                  preferred_element_type=jnp.float32)
    o_ref[...] = (acc + b2).astype(o_ref.dtype)


def bn_relu_conv_bn(x_nchw, w_oihw,
                    gamma1, beta1, mean1, var1,
                    gamma2, beta2, mean2, var2,
                    eps=1e-3):
    N, C, H, W = x_nchw.shape
    Cout, Cin, KH, KW = w_oihw.shape
    pad = (KW - 1) // 2
    assert KH == 1 and Cin == C and Cout == C
    assert W > pad, "roll+mask padding trick needs conv taps shorter than a W-row"

    # Fold the BatchNorms (inference / running-stats mode).
    inv1 = (gamma1 / jnp.sqrt(var1 + eps)).astype(jnp.float32)
    s1 = inv1.reshape(1, C)
    b1 = (beta1 - mean1 * inv1).reshape(1, C).astype(jnp.float32)
    inv2 = (gamma2 / jnp.sqrt(var2 + eps)).astype(jnp.float32)
    b2 = (beta2 - mean2 * inv2).reshape(1, C).astype(jnp.float32)
    params = jnp.concatenate([s1, b1, b2], axis=0)            # (3, C) f32

    # (Cout, Cin, 1, KW) -> (KW, Cin, Cout); fold BN2 scale over Cout; flatten
    # to the single (KW*Cin, Cout) matmul operand; cast to bf16.
    w = jnp.transpose(w_oihw[:, :, 0, :], (2, 1, 0)) * inv2[None, None, :]
    w2 = w.reshape(KW * C, C).astype(jnp.bfloat16)

    # NCHW -> NHWC -> dense (N*H*W, C) slab; bf16 on the wire (halves HBM bytes
    # and the boundary transpose cost); BN1/ReLU math is f32 inside the kernel.
    # TODO(synk): keep activations NHWC end-to-end in the surrounding model so
    # these boundary transposes disappear instead of running as separate XLA ops.
    x2d = jnp.transpose(x_nchw, (0, 2, 3, 1)).reshape(N * H * W, C)
    x2d = x2d.astype(jnp.bfloat16)

    # Block picking: whole W-rows per block, blk % 8 == 0, >= 2 grid steps when
    # N*H permits (v7x dual-TC megacore split), flattened-row cap ~2048 (fits
    # v7x's 64 MiB VMEM comfortably; big headroom on v5e/v6e's 128 MiB).
    # Grid uses cdiv + zero padding of the row axis, not an exact-divisor search.
    R = N * H
    g = 8 // math.gcd(W, 8)                   # minimal image-row granularity
    cap_rows = max(1, 2048 // W)              # image-row cap from flattened cap
    target = max(1, min(R // 2 if R >= 2 else 1, cap_rows))
    block_rows = max(g, (target // g) * g)
    num_blocks = pl.cdiv(R, block_rows)
    R_pad = num_blocks * block_rows
    if R_pad != R:
        x2d = jnp.pad(x2d, ((0, (R_pad - R) * W), (0, 0)))
    blk = block_rows * W

    out2d = pl.pallas_call(
        functools.partial(_bn_relu_conv_bn_kernel, width=W, kw=KW),
        out_shape=jax.ShapeDtypeStruct((R_pad * W, C), jnp.float32),
        grid=(num_blocks,),
        in_specs=[
            pl.BlockSpec((blk, C), lambda i: (i, 0)),        # activation slab
            pl.BlockSpec((KW * C, C), lambda i: (0, 0)),     # folded conv weights
            pl.BlockSpec((3, C), lambda i: (0, 0)),          # packed BN params
        ],
        out_specs=pl.BlockSpec((blk, C), lambda i: (i, 0)),
        scratch_shapes=[pltpu.VMEM((blk, KW * C), jnp.bfloat16)],
        compiler_params=pltpu.CompilerParams(
            dimension_semantics=("parallel",),
            vmem_limit_bytes=32 * 1024 * 1024),
    )(x2d, w2, params)

    out2d = out2d[:N * H * W]
    # (N*H*W, C) -> NCHW
    return jnp.transpose(out2d.reshape(N, H, W, C), (0, 3, 1, 2))


def _reference(x_nchw, w_oihw, g1, be1, m1, v1, g2, be2, m2, v2, eps=1e-3):
    x = (x_nchw - m1[None, :, None, None]) / jnp.sqrt(v1 + eps)[None, :, None, None]
    x = x * g1[None, :, None, None] + be1[None, :, None, None]
    x = jnp.maximum(x, 0.0)
    y = lax.conv_general_dilated(
        x, w_oihw, window_strides=(1, 1), padding=((0, 0), (3, 3)),
        dimension_numbers=("NCHW", "OIHW", "NCHW"))
    y = (y - m2[None, :, None, None]) / jnp.sqrt(v2 + eps)[None, :, None, None]
    return y * g2[None, :, None, None] + be2[None, :, None, None]


if __name__ == "__main__":
    key = jax.random.PRNGKey(0)
    ks = jax.random.split(key, 10)

    N, C, H, W = 1, 128, 12, 12
    KW = 7

    x = jax.random.normal(ks[0], (N, C, H, W), jnp.float32)
    w = jax.random.normal(ks[1], (C, C, 1, KW), jnp.float32) * 0.05

    gamma1 = jax.random.uniform(ks[2], (C,), jnp.float32, 0.5, 1.5)
    beta1 = jax.random.normal(ks[3], (C,), jnp.float32) * 0.1
    mean1 = jax.random.normal(ks[4], (C,), jnp.float32) * 0.1
    var1 = jax.random.uniform(ks[5], (C,), jnp.float32, 0.5, 1.5)

    gamma2 = jax.random.uniform(ks[6], (C,), jnp.float32, 0.5, 1.5)
    beta2 = jax.random.normal(ks[7], (C,), jnp.float32) * 0.1
    mean2 = jax.random.normal(ks[8], (C,), jnp.float32) * 0.1
    var2 = jax.random.uniform(ks[9], (C,), jnp.float32, 0.5, 1.5)

    fn = jax.jit(bn_relu_conv_bn)
    out = fn(x, w, gamma1, beta1, mean1, var1,
             gamma2, beta2, mean2, var2)
    out = jax.block_until_ready(out)

    ref = _reference(x, w, gamma1, beta1, mean1, var1,
                     gamma2, beta2, mean2, var2)
    assert out.shape == (N, C, H, W)
    # bf16 activations on the wire + bf16 matmul operands -> relaxed tolerance
    # vs the all-f32 reference.
    assert jnp.allclose(out, ref, rtol=5e-2, atol=5e-2), "mismatch vs reference"

    print("KERNEL_OK")
</pallas_src>

<mosaic_0001>
module attributes {stable_mosaic.version = 11 : i64} {
  func.func @_bn_relu_conv_bn_kernel(%arg0: i32, %arg1: memref<72x128xbf16, #tpu.memory_space<vmem>>, %arg2: memref<896x128xbf16, #tpu.memory_space<vmem>>, %arg3: memref<3x128xf32, #tpu.memory_space<vmem>>, %arg4: memref<72x128xf32, #tpu.memory_space<vmem>>, %arg5: memref<72x896xbf16, #tpu.memory_space<vmem>>) attributes {dimension_semantics = [#tpu.dimension_semantics<parallel>], iteration_bounds = array<i64: 2>, scalar_prefetch = 0 : i64, scratch_operands = 1 : i64, tpu.core_type = #tpu.core_type<tc>, window_params = [{transform_indices = @transform_0, window_bounds = array<i64: 72, 128>}, {pipeline_mode = #tpu.pipeline_mode<synchronous>, transform_indices = @transform_1, window_bounds = array<i64: 896, 128>}, {pipeline_mode = #tpu.pipeline_mode<synchronous>, transform_indices = @transform_2, window_bounds = array<i64: 3, 128>}, {transform_indices = @transform_3, window_bounds = array<i64: 72, 128>}]} {
    %c0 = arith.constant 0 : index
    %c0_0 = arith.constant 0 : index
    %0 = vector.load %arg3[%c0, %c0_0] : memref<3x128xf32, #tpu.memory_space<vmem>>, vector<3x128xf32>
    %1 = vector.extract_strided_slice %0 {offsets = [0, 0], sizes = [1, 128], strides = [1, 1]} : vector<3x128xf32> to vector<1x128xf32>
    %2 = vector.extract_strided_slice %0 {offsets = [1, 0], sizes = [1, 128], strides = [1, 1]} : vector<3x128xf32> to vector<1x128xf32>
    %3 = vector.extract_strided_slice %0 {offsets = [2, 0], sizes = [1, 128], strides = [1, 1]} : vector<3x128xf32> to vector<1x128xf32>
    %c0_1 = arith.constant 0 : index
    %c0_2 = arith.constant 0 : index
    %4 = vector.load %arg1[%c0_1, %c0_2] : memref<72x128xbf16, #tpu.memory_space<vmem>>, vector<72x128xbf16>
    %5 = arith.extf %4 : vector<72x128xbf16> to vector<72x128xf32>
    %6 = vector.broadcast %1 : vector<1x128xf32> to vector<72x128xf32>
    %7 = arith.mulf %5, %6 : vector<72x128xf32>
    %8 = vector.broadcast %2 : vector<1x128xf32> to vector<72x128xf32>
    %9 = arith.addf %7, %8 : vector<72x128xf32>
    %cst = arith.constant 0.000000e+00 : f32
    %10 = vector.broadcast %cst : f32 to vector<72x128xf32>
    %11 = arith.maximumf %9, %10 : vector<72x128xf32>
    %12 = tpu.iota {dimensions = array<i32: 0>} : vector<72x1xi32>
    %c12_i32 = arith.constant 12 : i32
    %c0_i32 = arith.constant 0 : i32
    %13 = arith.cmpi eq, %c12_i32, %c0_i32 : i32
    %c1_i32 = arith.constant 1 : i32
    %14 = arith.select %13, %c1_i32, %c12_i32 : i32
    %15 = vector.broadcast %14 : i32 to vector<72x1xi32>
    %16 = arith.remsi %12, %15 : vector<72x1xi32>
    %c0_i32_3 = arith.constant 0 : i32
    %17 = vector.broadcast %c0_i32_3 : i32 to vector<72x1xi32>
    %18 = arith.cmpi ne, %16, %17 : vector<72x1xi32>
    %c0_i32_4 = arith.constant 0 : i32
    %19 = vector.broadcast %c0_i32_4 : i32 to vector<72x1xi32>
    %20 = arith.cmpi slt, %16, %19 : vector<72x1xi32>
    %c0_i32_5 = arith.constant 0 : i32
    %21 = arith.cmpi slt, %14, %c0_i32_5 : i32
    %22 = vector.broadcast %21 : i1 to vector<72x1xi1>
    %23 = vector.broadcast %22 : vector<72x1xi1> to vector<72x1xi1>
    %24 = arith.xori %20, %23 : vector<72x1xi1>
    %25 = arith.andi %24, %18 : vector<72x1xi1>
    %26 = vector.broadcast %14 : i32 to vector<72x1xi32>
    %27 = arith.addi %16, %26 : vector<72x1xi32>
    %28 = arith.select %25, %27, %16 : vector<72x1xi1>, vector<72x1xi32>
    %c3_i32 = arith.constant 3 : i32
    %29 = tpu.dynamic_rotate %11 by %c3_i32 dim 0 : vector<72x128xf32>, i32 -> vector<72x128xf32>
    %c-3_i32 = arith.constant -3 : i32
    %30 = vector.broadcast %c-3_i32 : i32 to vector<72x1xi32>
    %31 = arith.addi %28, %30 : vector<72x1xi32>
    %c0_i32_6 = arith.constant 0 : i32
    %32 = vector.broadcast %c0_i32_6 : i32 to vector<72x1xi32>
    %33 = arith.cmpi sge, %31, %32 : vector<72x1xi32>
    %cst_7 = arith.constant 0.000000e+00 : f32
    %34 = vector.shape_cast %33 : vector<72x1xi1> to vector<72x1xi1>
    %35 = vector.broadcast %34 : vector<72x1xi1> to vector<72x128xi1>
    %36 = vector.broadcast %cst_7 : f32 to vector<72x128xf32>
    %37 = arith.select %35, %29, %36 : vector<72x128xi1>, vector<72x128xf32>
    %38 = arith.truncf %37 : vector<72x128xf32> to vector<72x128xbf16>
    %c0_8 = arith.constant 0 : index
    %c0_9 = arith.constant 0 : index
    %39 = vector.load %arg5[%c0_8, %c0_9] : memref<72x896xbf16, #tpu.memory_space<vmem>>, vector<72x128xbf16>
    tpu.vector_store %arg5[%c0_8, %c0_9], %38 {strides = array<i32>} : memref<72x896xbf16, #tpu.memory_space<vmem>>, vector<72x128xbf16>,
    %c2_i32 = arith.constant 2 : i32
    %40 = tpu.dynamic_rotate %11 by %c2_i32 dim 0 : vector<72x128xf32>, i32 -> vector<72x128xf32>
    %c-2_i32 = arith.constant -2 : i32
    %41 = vector.broadcast %c-2_i32 : i32 to vector<72x1xi32>
    %42 = arith.addi %28, %41 : vector<72x1xi32>
    %c0_i32_10 = arith.constant 0 : i32
    %43 = vector.broadcast %c0_i32_10 : i32 to vector<72x1xi32>
    %44 = arith.cmpi sge, %42, %43 : vector<72x1xi32>
    %cst_11 = arith.constant 0.000000e+00 : f32
    %45 = vector.shape_cast %44 : vector<72x1xi1> to vector<72x1xi1>
    %46 = vector.broadcast %45 : vector<72x1xi1> to vector<72x128xi1>
    %47 = vector.broadcast %cst_11 : f32 to vector<72x128xf32>
    %48 = arith.select %46, %40, %47 : vector<72x128xi1>, vector<72x128xf32>
    %49 = arith.truncf %48 : vector<72x128xf32> to vector<72x128xbf16>
    %c0_12 = arith.constant 0 : index
    %c128 = arith.constant 128 : index
    %50 = vector.load %arg5[%c0_12, %c128] : memref<72x896xbf16, #tpu.memory_space<vmem>>, vector<72x128xbf16>
    tpu.vector_store %arg5[%c0_12, %c128], %49 {strides = array<i32>} : memref<72x896xbf16, #tpu.memory_space<vmem>>, vector<72x128xbf16>,
    %c1_i32_13 = arith.constant 1 : i32
    %51 = tpu.dynamic_rotate %11 by %c1_i32_13 dim 0 : vector<72x128xf32>, i32 -> vector<72x128xf32>
    %c-1_i32 = arith.constant -1 : i32
    %52 = vector.broadcast %c-1_i32 : i32 to vector<72x1xi32>
    %53 = arith.addi %28, %52 : vector<72x1xi32>
    %c0_i32_14 = arith.constant 0 : i32
    %54 = vector.broadcast %c0_i32_14 : i32 to vector<72x1xi32>
    %55 = arith.cmpi sge, %53, %54 : vector<72x1xi32>
    %cst_15 = arith.constant 0.000000e+00 : f32
    %56 = vector.shape_cast %55 : vector<72x1xi1> to vector<72x1xi1>
    %57 = vector.broadcast %56 : vector<72x1xi1> to vector<72x128xi1>
    %58 = vector.broadcast %cst_15 : f32 to vector<72x128xf32>
    %59 = arith.select %57, %51, %58 : vector<72x128xi1>, vector<72x128xf32>
    %60 = arith.truncf %59 : vector<72x128xf32> to vector<72x128xbf16>
    %c0_16 = arith.constant 0 : index
    %c256 = arith.constant 256 : index
    %61 = vector.load %arg5[%c0_16, %c256] : memref<72x896xbf16, #tpu.memory_space<vmem>>, vector<72x128xbf16>
    tpu.vector_store %arg5[%c0_16, %c256], %60 {strides = array<i32>} : memref<72x896xbf16, #tpu.memory_space<vmem>>, vector<72x128xbf16>,
    %62 = arith.truncf %11 : vector<72x128xf32> to vector<72x128xbf16>
    %c0_17 = arith.constant 0 : index
    %c384 = arith.constant 384 : index
    %63 = vector.load %arg5[%c0_17, %c384] : memref<72x896xbf16, #tpu.memory_space<vmem>>, vector<72x128xbf16>
    tpu.vector_store %arg5[%c0_17, %c384], %62 {strides = array<i32>} : memref<72x896xbf16, #tpu.memory_space<vmem>>, vector<72x128xbf16>,
    %c71_i32 = arith.constant 71 : i32
    %64 = tpu.dynamic_rotate %11 by %c71_i32 dim 0 : vector<72x128xf32>, i32 -> vector<72x128xf32>
    %c1_i32_18 = arith.constant 1 : i32
    %65 = vector.broadcast %c1_i32_18 : i32 to vector<72x1xi32>
    %66 = arith.addi %28, %65 : vector<72x1xi32>
    %c12_i32_19 = arith.constant 12 : i32
    %67 = vector.broadcast %c12_i32_19 : i32 to vector<72x1xi32>
    %68 = arith.cmpi slt, %66, %67 : vector<72x1xi32>
    %cst_20 = arith.constant 0.000000e+00 : f32
    %69 = vector.shape_cast %68 : vector<72x1xi1> to vector<72x1xi1>
    %70 = vector.broadcast %69 : vector<72x1xi1> to vector<72x128xi1>
    %71 = vector.broadcast %cst_20 : f32 to vector<72x128xf32>
    %72 = arith.select %70, %64, %71 : vector<72x128xi1>, vector<72x128xf32>
    %73 = arith.truncf %72 : vector<72x128xf32> to vector<72x128xbf16>
    %c0_21 = arith.constant 0 : index
    %c512 = arith.constant 512 : index
    %74 = vector.load %arg5[%c0_21, %c512] : memref<72x896xbf16, #tpu.memory_space<vmem>>, vector<72x128xbf16>
    tpu.vector_store %arg5[%c0_21, %c512], %73 {strides = array<i32>} : memref<72x896xbf16, #tpu.memory_space<vmem>>, vector<72x128xbf16>,
    %c70_i32 = arith.constant 70 : i32
    %75 = tpu.dynamic_rotate %11 by %c70_i32 dim 0 : vector<72x128xf32>, i32 -> vector<72x128xf32>
    %c2_i32_22 = arith.constant 2 : i32
    %76 = vector.broadcast %c2_i32_22 : i32 to vector<72x1xi32>
    %77 = arith.addi %28, %76 : vector<72x1xi32>
    %c12_i32_23 = arith.constant 12 : i32
    %78 = vector.broadcast %c12_i32_23 : i32 to vector<72x1xi32>
    %79 = arith.cmpi slt, %77, %78 : vector<72x1xi32>
    %cst_24 = arith.constant 0.000000e+00 : f32
    %80 = vector.shape_cast %79 : vector<72x1xi1> to vector<72x1xi1>
    %81 = vector.broadcast %80 : vector<72x1xi1> to vector<72x128xi1>
    %82 = vector.broadcast %cst_24 : f32 to vector<72x128xf32>
    %83 = arith.select %81, %75, %82 : vector<72x128xi1>, vector<72x128xf32>
    %84 = arith.truncf %83 : vector<72x128xf32> to vector<72x128xbf16>
    %c0_25 = arith.constant 0 : index
    %c640 = arith.constant 640 : index
    %85 = vector.load %arg5[%c0_25, %c640] : memref<72x896xbf16, #tpu.memory_space<vmem>>, vector<72x128xbf16>
    tpu.vector_store %arg5[%c0_25, %c640], %84 {strides = array<i32>} : memref<72x896xbf16, #tpu.memory_space<vmem>>, vector<72x128xbf16>,
    %c69_i32 = arith.constant 69 : i32
    %86 = tpu.dynamic_rotate %11 by %c69_i32 dim 0 : vector<72x128xf32>, i32 -> vector<72x128xf32>
    %c3_i32_26 = arith.constant 3 : i32
    %87 = vector.broadcast %c3_i32_26 : i32 to vector<72x1xi32>
    %88 = arith.addi %28, %87 : vector<72x1xi32>
    %c12_i32_27 = arith.constant 12 : i32
    %89 = vector.broadcast %c12_i32_27 : i32 to vector<72x1xi32>
    %90 = arith.cmpi slt, %88, %89 : vector<72x1xi32>
    %cst_28 = arith.constant 0.000000e+00 : f32
    %91 = vector.shape_cast %90 : vector<72x1xi1> to vector<72x1xi1>
    %92 = vector.broadcast %91 : vector<72x1xi1> to vector<72x128xi1>
    %93 = vector.broadcast %cst_28 : f32 to vector<72x128xf32>
    %94 = arith.select %92, %86, %93 : vector<72x128xi1>, vector<72x128xf32>
    %95 = arith.truncf %94 : vector<72x128xf32> to vector<72x128xbf16>
    %c0_29 = arith.constant 0 : index
    %c768 = arith.constant 768 : index
    %96 = vector.load %arg5[%c0_29, %c768] : memref<72x896xbf16, #tpu.memory_space<vmem>>, vector<72x128xbf16>
    tpu.vector_store %arg5[%c0_29, %c768], %95 {strides = array<i32>} : memref<72x896xbf16, #tpu.memory_space<vmem>>, vector<72x128xbf16>,
    %c0_30 = arith.constant 0 : index
    %c0_31 = arith.constant 0 : index
    %97 = vector.load %arg5[%c0_30, %c0_31] : memref<72x896xbf16, #tpu.memory_space<vmem>>, vector<72x896xbf16>
    %c0_32 = arith.constant 0 : index
    %c0_33 = arith.constant 0 : index
    %98 = vector.load %arg2[%c0_32, %c0_33] : memref<896x128xbf16, #tpu.memory_space<vmem>>, vector<896x128xbf16>
    %cst_34 = arith.constant dense<0.000000e+00> : vector<72x128xf32>
    %99 = tpu.matmul %97, %98, %cst_34 {dimension_numbers = #tpu.dot_dimension_numbers<[1], [0], [0], [1], [0, 0, 1, 1], [], []>} : vector<72x896xbf16>, vector<896x128xbf16>, vector<72x128xf32> -> vector<72x128xf32>
    %100 = vector.broadcast %3 : vector<1x128xf32> to vector<72x128xf32>
    %101 = arith.addf %99, %100 : vector<72x128xf32>
    %c0_35 = arith.constant 0 : index
    %c0_36 = arith.constant 0 : index
    %102 = vector.load %arg4[%c0_35, %c0_36] : memref<72x128xf32, #tpu.memory_space<vmem>>, vector<72x128xf32>
    tpu.vector_store %arg4[%c0_35, %c0_36], %101 {strides = array<i32>} : memref<72x128xf32, #tpu.memory_space<vmem>>, vector<72x128xf32>,
    return
  }
  func.func @transform_0(%arg0: i32) -> (i32, i32) {
    %c0_i32 = arith.constant 0 : i32
    %c0_i32_0 = arith.constant 0 : i32
    return %arg0, %c0_i32 : i32, i32
  }
  func.func @transform_1(%arg0: i32) -> (i32, i32) {
    %c0_i32 = arith.constant 0 : i32
    %c0_i32_0 = arith.constant 0 : i32
    %c0_i32_1 = arith.constant 0 : i32
    return %c0_i32, %c0_i32_0 : i32, i32
  }
  func.func @transform_2(%arg0: i32) -> (i32, i32) {
    %c0_i32 = arith.constant 0 : i32
    %c0_i32_0 = arith.constant 0 : i32
    %c0_i32_1 = arith.constant 0 : i32
    return %c0_i32, %c0_i32_0 : i32, i32
  }
  func.func @transform_3(%arg0: i32) -> (i32, i32) {
    %c0_i32 = arith.constant 0 : i32
    %c0_i32_0 = arith.constant 0 : i32
    return %arg0, %c0_i32 : i32, i32
  }
}

</mosaic_0001>

<llo_original>
// kernel: bn_relu_conv_bn.1
$region0: #{bn_relu_conv_bn.1}
  #allocation0 [shape = 'u32[]', space=smem, size = 0x4, offset = 0x4, fixed_abs, tag = 'smem constant byte address 0x4 - core index']
  #allocation1 [shape = 'u32[72,128]{1,0:T(1,128)}', space=vmem, size = 0x9000, scoped, tag = 'internal scratch']
  #allocation2 [shape = 'bf16[72,896]{1,0:T(8,128)(2,1)}', space=vmem, size = 0x1f800, scoped, tag = 'scratch operand']
  %s0 = inlined_call_operand.vmem [shape: bf16[144,128], index: 0, kind: input, shape index: {}]
  %s1 = inlined_call_operand.vmem [shape: bf16[896,128], index: 1, kind: input, shape index: {}]
  %s2 = inlined_call_operand.vmem [shape: f32[3,128], index: 2, kind: input, shape index: {}]
  %s3 = inlined_call_operand.vmem [shape: f32[144,128], index: 3, kind: output, shape index: {}]
  %s4 = sld [smem:[#allocation0]]
  $region45: #{bn_relu_conv_bn.1} parent=0
    _
  %s6 = ssub.s32 1, %s4
  %s7 = scalar_select 0, %s6, %s4
  loop: start=0, step=1, limit=4
  $region2: #{bn_relu_conv_bn.1} parent=0 // loop_pre_header
    _
  $region3: #{bn_relu_conv_bn.1} parent=0 // loop_header
    %s9 = sphi 0, %s13
    %p10 = scmp.ge.s32.totalorder %s9, 4
    %s19 = sphi 0, %s21
    %s22 = sphi 0, %s19
    %s23 = sphi 0, %s22
    %s39 = sphi 0, %s23
    %s43 = sphi 0, %s43
    %s45 = sphi 0, %s43
    %s46 = sphi 0, %s45
    %s60 = sphi 0, %s46
    %s64 = sphi 0, %s64
    %s66 = sphi 0, %s64
    %s67 = sphi 0, %s66
    %s81 = sphi 0, %s67
    %s87 = sphi 0, %s89
    %s90 = sphi 0, %s87
    %s91 = sphi 0, %s90
    %s107 = sphi 0, %s91
  $region4: #{bn_relu_conv_bn.1} parent=0 // loop_header_branch
    %12 = sbr.rel (%p10) target = $region8
  $region5: #{bn_relu_conv_bn.1} parent=0 // loop_body
    %s14 = ssub.s32 %s9, 1
    %s15 = ssub.s32 %s9, 2
    %s16 = sadd.s32 %s9, 1
    %s17 = ssub.s32 %s9, %s16
    %p18 = scmp.eq.s32.totalorder %s17, 0
    %s20 = sadd.s32 %s19, 1
    %s21 = scalar_select %p18, %s19, %s20
    %p24 = pneg %p18
    %p25 = scmp.eq.s32.totalorder %s9, 1
    %p26 = por %p24, %p25
    %p27 = scmp.ne.s32.totalorder %s19, %s22
    %p28 = scmp.eq.s32.totalorder %s9, 0
    %p29 = por %p27, %p28
    %p30 = scmp.ne.s32.totalorder %s19, %s22
    %p31 = scmp.eq.s32.totalorder %s14, 1
    %p32 = por %p30, %p31
    %p33 = scmp.ne.s32.totalorder %s22, %s23
    %p34 = scmp.eq.s32.totalorder %s14, 0
    %p35 = por %p33, %p34
    %p36 = scmp.ne.s32.totalorder %s22, %s23
    %p37 = scmp.eq.s32.totalorder %s15, 1
    %p38 = por %p36, %p37
    %p40 = scmp.ne.s32.totalorder %s23, %s39
    %p41 = scmp.eq.s32.totalorder %s15, 0
    %p42 = por %p40, %p41
    %s44 = sadd.s32 %s43, 1
    %p47 = scmp.eq.s32.totalorder %s9, 1
    %p48 = scmp.ne.s32.totalorder %s43, %s45
    %p49 = scmp.eq.s32.totalorder %s9, 0
    %p50 = por %p48, %p49
    %p51 = scmp.ne.s32.totalorder %s43, %s45
    %p52 = scmp.eq.s32.totalorder %s14, 1
    %p53 = por %p51, %p52
    %p54 = scmp.ne.s32.totalorder %s45, %s46
    %p55 = scmp.eq.s32.totalorder %s14, 0
    %p56 = por %p54, %p55
    %p57 = scmp.ne.s32.totalorder %s45, %s46
    %p58 = scmp.eq.s32.totalorder %s15, 1
    %p59 = por %p57, %p58
    %p61 = scmp.ne.s32.totalorder %s46, %s60
    %p62 = scmp.eq.s32.totalorder %s15, 0
    %p63 = por %p61, %p62
    %s65 = sadd.s32 %s64, 1
    %p68 = scmp.eq.s32.totalorder %s9, 1
    %p69 = scmp.ne.s32.totalorder %s64, %s66
    %p70 = scmp.eq.s32.totalorder %s9, 0
    %p71 = por %p69, %p70
    %p72 = scmp.ne.s32.totalorder %s64, %s66
    %p73 = scmp.eq.s32.totalorder %s14, 1
    %p74 = por %p72, %p73
    %p75 = scmp.ne.s32.totalorder %s66, %s67
    %p76 = scmp.eq.s32.totalorder %s14, 0
    %p77 = por %p75, %p76
    %p78 = scmp.ne.s32.totalorder %s66, %s67
    %p79 = scmp.eq.s32.totalorder %s15, 1
    %p80 = por %p78, %p79
    %p82 = scmp.ne.s32.totalorder %s67, %s81
    %p83 = scmp.eq.s32.totalorder %s15, 0
    %p84 = por %p82, %p83
    %s85 = ssub.s32 %s9, %s16
    %p86 = scmp.eq.s32.totalorder %s85, 0
    %s88 = sadd.s32 %s87, 1
    %s89 = scalar_select %p86, %s87, %s88
    %p92 = pneg %p86
    %p93 = scmp.eq.s32.totalorder %s9, 1
    %p94 = por %p92, %p93
    %p95 = scmp.ne.s32.totalorder %s87, %s90
    %p96 = scmp.eq.s32.totalorder %s9, 0
    %p97 = por %p95, %p96
    %p98 = scmp.ne.s32.totalorder %s87, %s90
    %p99 = scmp.eq.s32.totalorder %s14, 1
    %p100 = por %p98, %p99
    %p101 = scmp.ne.s32.totalorder %s90, %s91
    %p102 = scmp.eq.s32.totalorder %s14, 0
    %p103 = por %p101, %p102
    %p104 = scmp.ne.s32.totalorder %s90, %s91
    %p105 = scmp.eq.s32.totalorder %s15, 1
    %p106 = por %p104, %p105
    %p108 = scmp.ne.s32.totalorder %s91, %s107
    %p109 = scmp.eq.s32.totalorder %s15, 0
    %p110 = por %p108, %p109
    %p111 = scmp.le.s32.totalorder 1, %s9
    %p112 = scmp.lt.s32.totalorder %s9, 3
    %p113 = pnand %p111, %p112
    %p114 = pneg %p113
    // Predicated region
    $region9: #{bn_relu_conv_bn.1} parent=5 // pred_check
      _
    $region10: #{bn_relu_conv_bn.1} parent=5 // pred_check_branch
      %116 = sbr.rel (%p113) target = $region12
    $region11: #{bn_relu_conv_bn.1} parent=5 // pred_region
      %s117 = ssub.s32 %s9, 1
      // Predicated region
      $region13: #{bn_relu_conv_bn.1} parent=11 // pred_check
        %p118 = pneg %p56
      $region14: #{bn_relu_conv_bn.1} parent=11 // pred_check_branch
        %120 = sbr.rel (%p118) target = $region16
      $region15: #{bn_relu_conv_bn.1} parent=11 // pred_region
        _
      $region16: #{bn_relu_conv_bn.1} parent=11 // pred_fallthru
        _
      // Predicated region
      $region17: #{bn_relu_conv_bn.1} parent=11 // pred_check
        %p121 = pneg %p77
      $region18: #{bn_relu_conv_bn.1} parent=11 // pred_check_branch
        %123 = sbr.rel (%p121) target = $region20
      $region19: #{bn_relu_conv_bn.1} parent=11 // pred_region
        _
      $region20: #{bn_relu_conv_bn.1} parent=11 // pred_fallthru
        _
    $region12: #{bn_relu_conv_bn.1} parent=5 // pred_fallthru
      _
    %p124 = scmp.lt.s32.totalorder %s9, 2
    // Predicated region
    $region21: #{bn_relu_conv_bn.1} parent=5 // pred_check
      %p125 = pneg %p124
    $region22: #{bn_relu_conv_bn.1} parent=5 // pred_check_branch
      %127 = sbr.rel (%p125) target = $region24
    $region23: #{bn_relu_conv_bn.1} parent=5 // pred_region
      // Predicated region
      $region25: #{bn_relu_conv_bn.1} parent=23 // pred_check
        %p128 = pneg %p29
      $region26: #{bn_relu_conv_bn.1} parent=23 // pred_check_branch
        %130 = sbr.rel (%p128) target = $region28
      $region27: #{bn_relu_conv_bn.1} parent=23 // pred_region
        %s131 = smul.u32 9, %s9
        %p132 = scmp.lt.s32.totalorder %s131, 17
        %s133 = scalar_select %p132, %s131, 17
        %s134 = smul.addr %s133, 4
        %s135 = scalar_lea.vmem %s0, %s134
        %s136 = smul.u32 9, %s9
      $region28: #{bn_relu_conv_bn.1} parent=23 // pred_fallthru
        _
    $region24: #{bn_relu_conv_bn.1} parent=5 // pred_fallthru
      _
    %p137 = scmp.le.s32.totalorder 1, %s9
    %p138 = scmp.lt.s32.totalorder %s9, 3
    %p139 = pnand %p137, %p138
    %p140 = pneg %p139
    // Predicated region
    $region29: #{bn_relu_conv_bn.1} parent=5 // pred_check
      _
    $region30: #{bn_relu_conv_bn.1} parent=5 // pred_check_branch
      %142 = sbr.rel (%p139) target = $region32
    $region31: #{bn_relu_conv_bn.1} parent=5 // pred_region
      %s143 = ssub.s32 %s9, 1
      %s144 = smul.u32 9, %s14
      %p145 = scmp.lt.s32.totalorder %s144, 17
      %s146 = scalar_select %p145, %s144, 17
      %s147 = smul.addr %s146, 4
      %s148 = scalar_lea.vmem %s0, %s147
      %p149 = pneg %p35
      %p150 = pneg %p32
      %p151 = pneg %p56
      %p152 = pneg %p53
      %p153 = pneg %p77
      %p154 = pneg %p74
      %p155 = pneg %p103
      %p156 = pneg %p100
      %s157 = smul.u32 9, %s14
      %p158 = scmp.lt.s32.totalorder %s157, 17
      %s159 = scalar_select %p158, %s157, 17
      %s160 = smul.addr %s159, 8
      %s161 = scalar_lea.vmem %s3, %s160
      %s162 = smul.u32 9, %s14
      %p163 = scmp.lt.s32.totalorder %s162, 17
      %s164 = scalar_select %p163, %s162, 17
      %s165 = smul.addr %s164, 4
      %s166 = scalar_lea.vmem %s0, %s165
      %s167 = smul.u32 9, %s14
      %s168 = smul.u32 9, %s14
      %p169 = scmp.lt.s32.totalorder %s168, 17
      %s170 = scalar_select %p169, %s168, 17
      %s171 = smul.addr %s170, 8
      %s172 = scalar_lea.vmem %s3, %s171
      %s173 = smul.u32 9, %s14
      %v174 = vld [vmem:[%s2] sm:$0x7]
      %v175 = vld [vmem:[%s166] sm:$0xf]
      %v176 = vld [vmem:[%s166 + $0x4] sm:$0xf]
      %v177 = vld [vmem:[%s166 + $0x8] sm:$0xf]
      %v178 = vld [vmem:[%s166 + $0xc] sm:$0xf]
      %v179 = vld [vmem:[%s166 + $0x10] sm:$0xf]
      %v180 = vld [vmem:[%s166 + $0x14] sm:$0xf]
      %v181 = vld [vmem:[%s166 + $0x18] sm:$0xf]
      %v182 = vld [vmem:[%s166 + $0x1c] sm:$0xf]
      %v183 = vld [vmem:[%s166 + $0x20] sm:$0xf]
      %v184 = vunpack.c.l.bf16 %v175
      %v185 = vunpack.c.l.bf16 %v176
      %v186 = vunpack.c.l.bf16 %v177
      %v187 = vunpack.c.l.bf16 %v178
      %v188 = vunpack.c.l.bf16 %v179
      %v189 = vunpack.c.l.bf16 %v180
      %v190 = vunpack.c.l.bf16 %v181
      %v191 = vunpack.c.l.bf16 %v182
      %v192 = vunpack.c.l.bf16 %v183
      %v193 = vperm.slane %v174, 0
      %v194 = vmul.f32 %v184, %v193
      %v195 = vmul.f32 %v185, %v193
      %v196 = vmul.f32 %v186, %v193
      %v197 = vmul.f32 %v187, %v193
      %v198 = vmul.f32 %v188, %v193
      %v199 = vmul.f32 %v189, %v193
      %v200 = vmul.f32 %v190, %v193
      %v201 = vmul.f32 %v191, %v193
      %v202 = vmul.f32 %v192, %v193
      %v203 = vperm.slane %v174, 1
      %v204 = vadd.f32 %v194, %v203
      %v205 = vadd.f32 %v195, %v203
      %v206 = vadd.f32 %v196, %v203
      %v207 = vadd.f32 %v197, %v203
      %v208 = vadd.f32 %v198, %v203
      %v209 = vadd.f32 %v199, %v203
      %v210 = vadd.f32 %v200, %v203
      %v211 = vadd.f32 %v201, %v203
      %v212 = vadd.f32 %v202, %v203
      %v213 = vmax.f32 %v204, 0.0
      %v214 = vmax.f32 %v205, 0.0
      %v215 = vmax.f32 %v206, 0.0
      %v216 = vmax.f32 %v207, 0.0
      %v217 = vmax.f32 %v208, 0.0
      %v218 = vmax.f32 %v209, 0.0
      %v219 = vmax.f32 %v210, 0.0
      %v220 = vmax.f32 %v211, 0.0
      %v221 = vmax.f32 %v212, 0.0
      %v222 = vlaneseq
      %v223 = vshrl.u32 %v222, 7
      %v224 = vadd.s32 %v223, 8
      %v225 = vadd.s32 %v223, 16
      %v226 = vadd.s32 %v223, 24
      %v227 = vadd.s32 %v223, 32
      %v228 = vadd.s32 %v223, 40
      %v229 = vadd.s32 %v223, 48
      %v230 = vadd.s32 %v223, 56
      %v231 = vadd.s32 %v223, 64
      %vm232 = vcmp.lt.s32.totalorder %v223, 0
      %v233 = vsub.s32 0, %v223
      %v234 = vsel %vm232, %v233, %v223
      %v235 = vand.u32 %v234, 65535
      %v236 = vshrl.u32 %v234, 16
      %v238 = vmul.u32 %v235, 43691
      %v239 = vmul.u32 %v235, 43690
      %v240 = vmul.u32 %v236, 43691
      %v241 = vmul.u32 %v236, 43690
      %v242 = vshll.u32 %v239, 16
      %v243 = vshrl.u32 %v239, 16
      %v244 = vshll.u32 %v240, 16
      %v245 = vshrl.u32 %v240, 16
      %vm246 = vc.u32 %v238, %v242
      %v247 = vsel %vm246, 1, 0
      %v248 = vadd.s32 %v238, %v242
      %v249 = vadd.s32 %v241, %v247
      %vm250 = vc.u32 %v248, %v244
      %v251 = vsel %vm250, 1, 0
      %v252 = vadd.s32 %v248, %v244
      %v253 = vadd.s32 %v249, %v251
      %v254 = vadd.s32 %v253, %v243
      %v255 = vadd.s32 %v254, %v245
      %v256 = vshrl.u32 %v255, 3
      %v257 = vmul.u32 %v256, 12
      %v258 = vsub.s32 %v234, %v257
      %v259 = vsub.s32 0, %v258
      %v260 = vsel %vm232, %v259, %v258
      %vm261 = vcmp.lt.s32.totalorder %v224, 0
      %v262 = vsub.s32 0, %v224
      %v263 = vsel %vm261, %v262, %v224
      %v264 = vand.u32 %v263, 65535
      %v265 = vshrl.u32 %v263, 16
      %v267 = vmul.u32 %v264, 43691
      %v268 = vmul.u32 %v264, 43690
      %v269 = vmul.u32 %v265, 43691
      %v270 = vmul.u32 %v265, 43690
      %v271 = vshll.u32 %v268, 16
      %v272 = vshrl.u32 %v268, 16
      %v273 = vshll.u32 %v269, 16
      %v274 = vshrl.u32 %v269, 16
      %vm275 = vc.u32 %v267, %v271
      %v276 = vsel %vm275, 1, 0
      %v277 = vadd.s32 %v267, %v271
      %v278 = vadd.s32 %v270, %v276
      %vm279 = vc.u32 %v277, %v273
      %v280 = vsel %vm279, 1, 0
      %v281 = vadd.s32 %v277, %v273
      %v282 = vadd.s32 %v278, %v280
      %v283 = vadd.s32 %v282, %v272
      %v284 = vadd.s32 %v283, %v274
      %v285 = vshrl.u32 %v284, 3
      %v286 = vmul.u32 %v285, 12
      %v287 = vsub.s32 %v263, %v286
      %v288 = vsub.s32 0, %v287
      %v289 = vsel %vm261, %v288, %v287
      %vm290 = vcmp.lt.s32.totalorder %v225, 0
      %v291 = vsub.s32 0, %v225
      %v292 = vsel %vm290, %v291, %v225
      %v293 = vand.u32 %v292, 65535
      %v294 = vshrl.u32 %v292, 16
      %v296 = vmul.u32 %v293, 43691
      %v297 = vmul.u32 %v293, 43690
      %v298 = vmul.u32 %v294, 43691
      %v299 = vmul.u32 %v294, 43690
      %v300 = vshll.u32 %v297, 16
      %v301 = vshrl.u32 %v297, 16
      %v302 = vshll.u32 %v298, 16
      %v303 = vshrl.u32 %v298, 16
      %vm304 = vc.u32 %v296, %v300
      %v305 = vsel %vm304, 1, 0
      %v306 = vadd.s32 %v296, %v300
      %v307 = vadd.s32 %v299, %v305
      %vm308 = vc.u32 %v306, %v302
      %v309 = vsel %vm308, 1, 0
      %v310 = vadd.s32 %v306, %v302
      %v311 = vadd.s32 %v307, %v309
      %v312 = vadd.s32 %v311, %v301
      %v313 = vadd.s32 %v312, %v303
      %v314 = vshrl.u32 %v313, 3
      %v315 = vmul.u32 %v314, 12
      %v316 = vsub.s32 %v292, %v315
      %v317 = vsub.s32 0, %v316
      %v318 = vsel %vm290, %v317, %v316
      %vm319 = vcmp.lt.s32.totalorder %v226, 0
      %v320 = vsub.s32 0, %v226
      %v321 = vsel %vm319, %v320, %v226
      %v322 = vand.u32 %v321, 65535
      %v323 = vshrl.u32 %v321, 16
      %v325 = vmul.u32 %v322, 43691
      %v326 = vmul.u32 %v322, 43690
      %v327 = vmul.u32 %v323, 43691
      %v328 = vmul.u32 %v323, 43690
      %v329 = vshll.u32 %v326, 16
      %v330 = vshrl.u32 %v326, 16
      %v331 = vshll.u32 %v327, 16
      %v332 = vshrl.u32 %v327, 16
      %vm333 = vc.u32 %v325, %v329
      %v334 = vsel %vm333, 1, 0
      %v335 = vadd.s32 %v325, %v329
      %v336 = vadd.s32 %v328, %v334
      %vm337 = vc.u32 %v335, %v331
      %v338 = vsel %vm337, 1, 0
      %v339 = vadd.s32 %v335, %v331
      %v340 = vadd.s32 %v336, %v338
      %v341 = vadd.s32 %v340, %v330
      %v342 = vadd.s32 %v341, %v332
      %v343 = vshrl.u32 %v342, 3
      %v344 = vmul.u32 %v343, 12
      %v345 = vsub.s32 %v321, %v344
      %v346 = vsub.s32 0, %v345
      %v347 = vsel %vm319, %v346, %v345
      %vm348 = vcmp.lt.s32.totalorder %v227, 0
      %v349 = vsub.s32 0, %v227
      %v350 = vsel %vm348, %v349, %v227
      %v351 = vand.u32 %v350, 65535
      %v352 = vshrl.u32 %v350, 16
      %v354 = vmul.u32 %v351, 43691
      %v355 = vmul.u32 %v351, 43690
      %v356 = vmul.u32 %v352, 43691
      %v357 = vmul.u32 %v352, 43690
      %v358 = vshll.u32 %v355, 16
      %v359 = vshrl.u32 %v355, 16
      %v360 = vshll.u32 %v356, 16
      %v361 = vshrl.u32 %v356, 16
      %vm362 = vc.u32 %v354, %v358
      %v363 = vsel %vm362, 1, 0
      %v364 = vadd.s32 %v354, %v358
      %v365 = vadd.s32 %v357, %v363
      %vm366 = vc.u32 %v364, %v360
      %v367 = vsel %vm366, 1, 0
      %v368 = vadd.s32 %v364, %v360
      %v369 = vadd.s32 %v365, %v367
      %v370 = vadd.s32 %v369, %v359
      %v371 = vadd.s32 %v370, %v361
      %v372 = vshrl.u32 %v371, 3
      %v373 = vmul.u32 %v372, 12
      %v374 = vsub.s32 %v350, %v373
      %v375 = vsub.s32 0, %v374
      %v376 = vsel %vm348, %v375, %v374
      %vm377 = vcmp.lt.s32.totalorder %v228, 0
      %v378 = vsub.s32 0, %v228
      %v379 = vsel %vm377, %v378, %v228
      %v380 = vand.u32 %v379, 65535
      %v381 = vshrl.u32 %v379, 16
      %v383 = vmul.u32 %v380, 43691
      %v384 = vmul.u32 %v380, 43690
      %v385 = vmul.u32 %v381, 43691
      %v386 = vmul.u32 %v381, 43690
      %v387 = vshll.u32 %v384, 16
      %v388 = vshrl.u32 %v384, 16
      %v389 = vshll.u32 %v385, 16
      %v390 = vshrl.u32 %v385, 16
      %vm391 = vc.u32 %v383, %v387
      %v392 = vsel %vm391, 1, 0
      %v393 = vadd.s32 %v383, %v387
      %v394 = vadd.s32 %v386, %v392
      %vm395 = vc.u32 %v393, %v389
      %v396 = vsel %vm395, 1, 0
      %v397 = vadd.s32 %v393, %v389
      %v398 = vadd.s32 %v394, %v396
      %v399 = vadd.s32 %v398, %v388
      %v400 = vadd.s32 %v399, %v390
      %v401 = vshrl.u32 %v400, 3
      %v402 = vmul.u32 %v401, 12
      %v403 = vsub.s32 %v379, %v402
      %v404 = vsub.s32 0, %v403
      %v405 = vsel %vm377, %v404, %v403
      %vm406 = vcmp.lt.s32.totalorder %v229, 0
      %v407 = vsub.s32 0, %v229
      %v408 = vsel %vm406, %v407, %v229
      %v409 = vand.u32 %v408, 65535
      %v410 = vshrl.u32 %v408, 16
      %v412 = vmul.u32 %v409, 43691
      %v413 = vmul.u32 %v409, 43690
      %v414 = vmul.u32 %v410, 43691
      %v415 = vmul.u32 %v410, 43690
      %v416 = vshll.u32 %v413, 16
      %v417 = vshrl.u32 %v413, 16
      %v418 = vshll.u32 %v414, 16
      %v419 = vshrl.u32 %v414, 16
      %vm420 = vc.u32 %v412, %v416
      %v421 = vsel %vm420, 1, 0
      %v422 = vadd.s32 %v412, %v416
      %v423 = vadd.s32 %v415, %v421
      %vm424 = vc.u32 %v422, %v418
      %v425 = vsel %vm424, 1, 0
      %v426 = vadd.s32 %v422, %v418
      %v427 = vadd.s32 %v423, %v425
      %v428 = vadd.s32 %v427, %v417
      %v429 = vadd.s32 %v428, %v419
      %v430 = vshrl.u32 %v429, 3
      %v431 = vmul.u32 %v430, 12
      %v432 = vsub.s32 %v408, %v431
      %v433 = vsub.s32 0, %v432
      %v434 = vsel %vm406, %v433, %v432
      %vm435 = vcmp.lt.s32.totalorder %v230, 0
      %v436 = vsub.s32 0, %v230
      %v437 = vsel %vm435, %v436, %v230
      %v438 = vand.u32 %v437, 65535
      %v439 = vshrl.u32 %v437, 16
      %v441 = vmul.u32 %v438, 43691
      %v442 = vmul.u32 %v438, 43690
      %v443 = vmul.u32 %v439, 43691
      %v444 = vmul.u32 %v439, 43690
      %v445 = vshll.u32 %v442, 16
      %v446 = vshrl.u32 %v442, 16
      %v447 = vshll.u32 %v443, 16
      %v448 = vshrl.u32 %v443, 16
      %vm449 = vc.u32 %v441, %v445
      %v450 = vsel %vm449, 1, 0
      %v451 = vadd.s32 %v441, %v445
      %v452 = vadd.s32 %v444, %v450
      %vm453 = vc.u32 %v451, %v447
      %v454 = vsel %vm453, 1, 0
      %v455 = vadd.s32 %v451, %v447
      %v456 = vadd.s32 %v452, %v454
      %v457 = vadd.s32 %v456, %v446
      %v458 = vadd.s32 %v457, %v448
      %v459 = vshrl.u32 %v458, 3
      %v460 = vmul.u32 %v459, 12
      %v461 = vsub.s32 %v437, %v460
      %v462 = vsub.s32 0, %v461
      %v463 = vsel %vm435, %v462, %v461
      %vm464 = vcmp.lt.s32.totalorder %v231, 0
      %v465 = vsub.s32 0, %v231
      %v466 = vsel %vm464, %v465, %v231
      %v467 = vand.u32 %v466, 65535
      %v468 = vshrl.u32 %v466, 16
      %v470 = vmul.u32 %v467, 43691
      %v471 = vmul.u32 %v467, 43690
      %v472 = vmul.u32 %v468, 43691
      %v473 = vmul.u32 %v468, 43690
      %v474 = vshll.u32 %v471, 16
      %v475 = vshrl.u32 %v471, 16
      %v476 = vshll.u32 %v472, 16
      %v477 = vshrl.u32 %v472, 16
      %vm478 = vc.u32 %v470, %v474
      %v479 = vsel %vm478, 1, 0
      %v480 = vadd.s32 %v470, %v474
      %v481 = vadd.s32 %v473, %v479
      %vm482 = vc.u32 %v480, %v476
      %v483 = vsel %vm482, 1, 0
      %v484 = vadd.s32 %v480, %v476
      %v485 = vadd.s32 %v481, %v483
      %v486 = vadd.s32 %v485, %v475
      %v487 = vadd.s32 %v486, %v477
      %v488 = vshrl.u32 %v487, 3
      %v489 = vmul.u32 %v488, 12
      %v490 = vsub.s32 %v466, %v489
      %v491 = vsub.s32 0, %v490
      %v492 = vsel %vm464, %v491, %v490
      %vm493 = vcmp.ne.s32.totalorder %v260, 0
      %vm494 = vcmp.ne.s32.totalorder %v289, 0
      %vm495 = vcmp.ne.s32.totalorder %v318, 0
      %vm496 = vcmp.ne.s32.totalorder %v347, 0
      %vm497 = vcmp.ne.s32.totalorder %v376, 0
      %vm498 = vcmp.ne.s32.totalorder %v405, 0
      %vm499 = vcmp.ne.s32.totalorder %v434, 0
      %vm500 = vcmp.ne.s32.totalorder %v463, 0
      %vm501 = vcmp.ne.s32.totalorder %v492, 0
      %vm502 = vcmp.lt.s32.totalorder %v260, 0
      %vm503 = vcmp.lt.s32.totalorder %v289, 0
      %vm504 = vcmp.lt.s32.totalorder %v318, 0
      %vm505 = vcmp.lt.s32.totalorder %v347, 0
      %vm506 = vcmp.lt.s32.totalorder %v376, 0
      %vm507 = vcmp.lt.s32.totalorder %v405, 0
      %vm508 = vcmp.lt.s32.totalorder %v434, 0
      %vm509 = vcmp.lt.s32.totalorder %v463, 0
      %vm510 = vcmp.lt.s32.totalorder %v492, 0
      %vm511 = vmand %vm502, %vm493
      %vm512 = vmand %vm503, %vm494
      %vm513 = vmand %vm504, %vm495
      %vm514 = vmand %vm505, %vm496
      %vm515 = vmand %vm506, %vm497
      %vm516 = vmand %vm507, %vm498
      %vm517 = vmand %vm508, %vm499
      %vm518 = vmand %vm509, %vm500
      %vm519 = vmand %vm510, %vm501
      %v520 = vadd.s32 %v260, 12
      %v521 = vadd.s32 %v289, 12
      %v522 = vadd.s32 %v318, 12
      %v523 = vadd.s32 %v347, 12
      %v524 = vadd.s32 %v376, 12
      %v525 = vadd.s32 %v405, 12
      %v526 = vadd.s32 %v434, 12
      %v527 = vadd.s32 %v463, 12
      %v528 = vadd.s32 %v492, 12
      %v529 = vsel %vm511, %v520, %v260
      %v530 = vsel %vm512, %v521, %v289
      %v531 = vsel %vm513, %v522, %v318
      %v532 = vsel %vm514, %v523, %v347
      %v533 = vsel %vm515, %v524, %v376
      %v534 = vsel %vm516, %v525, %v405
      %v535 = vsel %vm517, %v526, %v434
      %v536 = vsel %vm518, %v527, %v463
      %v537 = vsel %vm519, %v528, %v492
      %v538 = vrot.slane %v213, 5
      %v539 = vrot.slane %v214, 5
      %v540 = vrot.slane %v215, 5
      %v541 = vrot.slane %v216, 5
      %v542 = vrot.slane %v217, 5
      %v543 = vrot.slane %v218, 5
      %v544 = vrot.slane %v219, 5
      %v545 = vrot.slane %v220, 5
      %v546 = vrot.slane %v221, 5
      %vm547 = vcmp.lt.s32.totalorder %v223, 3
      %v548 = vsel %vm547, %v545, %v546
      %v549 = vsel %vm547, %v544, %v545
      %v550 = vsel %vm547, %v543, %v544
      %v551 = vsel %vm547, %v542, %v543
      %v552 = vsel %vm547, %v541, %v542
      %v553 = vsel %vm547, %v540, %v541
      %v554 = vsel %vm547, %v539, %v540
      %v555 = vsel %vm547, %v538, %v539
      %v556 = vsel %vm547, %v546, %v538
      %v557 = vadd.s32 %v529, 4294967293
      %v558 = vadd.s32 %v530, 4294967293
      %v559 = vadd.s32 %v531, 4294967293
      %v560 = vadd.s32 %v532, 4294967293
      %v561 = vadd.s32 %v533, 4294967293
      %v562 = vadd.s32 %v534, 4294967293
      %v563 = vadd.s32 %v535, 4294967293
      %v564 = vadd.s32 %v536, 4294967293
      %v565 = vadd.s32 %v537, 4294967293
      %vm566 = vcmp.ge.s32.totalorder %v557, 0
      %vm567 = vcmp.ge.s32.totalorder %v558, 0
      %vm568 = vcmp.ge.s32.totalorder %v559, 0
      %vm569 = vcmp.ge.s32.totalorder %v560, 0
      %vm570 = vcmp.ge.s32.totalorder %v561, 0
      %vm571 = vcmp.ge.s32.totalorder %v562, 0
      %vm572 = vcmp.ge.s32.totalorder %v563, 0
      %vm573 = vcmp.ge.s32.totalorder %v564, 0
      %vm574 = vcmp.ge.s32.totalorder %v565, 0
      %v575 = vsel %vm566, 1, 0
      %v576 = vsel %vm567, 1, 0
      %v577 = vsel %vm568, 1, 0
      %v578 = vsel %vm569, 1, 0
      %v579 = vsel %vm570, 1, 0
      %v580 = vsel %vm571, 1, 0
      %v581 = vsel %vm572, 1, 0
      %v582 = vsel %vm573, 1, 0
      %v583 = vsel %vm574, 1, 0
      %vm584 = vcmp.eq.s32.totalorder %v575, 1
      %vm585 = vcmp.eq.s32.totalorder %v576, 1
      %vm586 = vcmp.eq.s32.totalorder %v577, 1
      %vm587 = vcmp.eq.s32.totalorder %v578, 1
      %vm588 = vcmp.eq.s32.totalorder %v579, 1
      %vm589 = vcmp.eq.s32.totalorder %v580, 1
      %vm590 = vcmp.eq.s32.totalorder %v581, 1
      %vm591 = vcmp.eq.s32.totalorder %v582, 1
      %vm592 = vcmp.eq.s32.totalorder %v583, 1
      %v593 = vsel %vm584, %v556, 0.0
      %v594 = vsel %vm585, %v555, 0.0
      %v595 = vsel %vm586, %v554, 0.0
      %v596 = vsel %vm587, %v553, 0.0
      %v597 = vsel %vm588, %v552, 0.0
      %v598 = vsel %vm589, %v551, 0.0
      %v599 = vsel %vm590, %v550, 0.0
      %v600 = vsel %vm591, %v549, 0.0
      %v601 = vsel %vm592, %v548, 0.0
      %v602 = vpack.c.bf16 %v593, %v593
      %v603 = vpack.c.bf16 %v594, %v594
      %v604 = vpack.c.bf16 %v595, %v595
      %v605 = vpack.c.bf16 %v596, %v596
      %v606 = vpack.c.bf16 %v597, %v597
      %v607 = vpack.c.bf16 %v598, %v598
      %v608 = vpack.c.bf16 %v599, %v599
      %v609 = vpack.c.bf16 %v600, %v600
      %v610 = vpack.c.bf16 %v601, %v601
      %611 = vst [vmem:[#allocation2] sm:$0xf] %v602
      %612 = vst [vmem:[#allocation2 + $0x1c] sm:$0xf] %v603
      %613 = vst [vmem:[#allocation2 + $0x38] sm:$0xf] %v604
      %614 = vst [vmem:[#allocation2 + $0x54] sm:$0xf] %v605
      %615 = vst [vmem:[#allocation2 + $0x70] sm:$0xf] %v606
      %616 = vst [vmem:[#allocation2 + $0x8c] sm:$0xf] %v607
      %617 = vst [vmem:[#allocation2 + $0xa8] sm:$0xf] %v608
      %618 = vst [vmem:[#allocation2 + $0xc4] sm:$0xf] %v609
      %619 = vst [vmem:[#allocation2 + $0xe0] sm:$0xf] %v610
      %v620 = vrot.slane %v213, 6
      %v621 = vrot.slane %v214, 6
      %v622 = vrot.slane %v215, 6
      %v623 = vrot.slane %v216, 6
      %v624 = vrot.slane %v217, 6
      %v625 = vrot.slane %v218, 6
      %v626 = vrot.slane %v219, 6
      %v627 = vrot.slane %v220, 6
      %v628 = vrot.slane %v221, 6
      %vm629 = vcmp.lt.s32.totalorder %v223, 2
      %v630 = vsel %vm629, %v627, %v628
      %v631 = vsel %vm629, %v626, %v627
      %v632 = vsel %vm629, %v625, %v626
      %v633 = vsel %vm629, %v624, %v625
      %v634 = vsel %vm629, %v623, %v624
      %v635 = vsel %vm629, %v622, %v623
      %v636 = vsel %vm629, %v621, %v622
      %v637 = vsel %vm629, %v620, %v621
      %v638 = vsel %vm629, %v628, %v620
      %v639 = vadd.s32 %v529, 4294967294
      %v640 = vadd.s32 %v530, 4294967294
      %v641 = vadd.s32 %v531, 4294967294
      %v642 = vadd.s32 %v532, 4294967294
      %v643 = vadd.s32 %v533, 4294967294
      %v644 = vadd.s32 %v534, 4294967294
      %v645 = vadd.s32 %v535, 4294967294
      %v646 = vadd.s32 %v536, 4294967294
      %v647 = vadd.s32 %v537, 4294967294
      %vm648 = vcmp.ge.s32.totalorder %v639, 0
      %vm649 = vcmp.ge.s32.totalorder %v640, 0
      %vm650 = vcmp.ge.s32.totalorder %v641, 0
      %vm651 = vcmp.ge.s32.totalorder %v642, 0
      %vm652 = vcmp.ge.s32.totalorder %v643, 0
      %vm653 = vcmp.ge.s32.totalorder %v644, 0
      %vm654 = vcmp.ge.s32.totalorder %v645, 0
      %vm655 = vcmp.ge.s32.totalorder %v646, 0
      %vm656 = vcmp.ge.s32.totalorder %v647, 0
      %v657 = vsel %vm648, 1, 0
      %v658 = vsel %vm649, 1, 0
      %v659 = vsel %vm650, 1, 0
      %v660 = vsel %vm651, 1, 0
      %v661 = vsel %vm652, 1, 0
      %v662 = vsel %vm653, 1, 0
      %v663 = vsel %vm654, 1, 0
      %v664 = vsel %vm655, 1, 0
      %v665 = vsel %vm656, 1, 0
      %vm666 = vcmp.eq.s32.totalorder %v657, 1
      %vm667 = vcmp.eq.s32.totalorder %v658, 1
      %vm668 = vcmp.eq.s32.totalorder %v659, 1
      %vm669 = vcmp.eq.s32.totalorder %v660, 1
      %vm670 = vcmp.eq.s32.totalorder %v661, 1
      %vm671 = vcmp.eq.s32.totalorder %v662, 1
      %vm672 = vcmp.eq.s32.totalorder %v663, 1
      %vm673 = vcmp.eq.s32.totalorder %v664, 1
      %vm674 = vcmp.eq.s32.totalorder %v665, 1
      %v675 = vsel %vm666, %v638, 0.0
      %v676 = vsel %vm667, %v637, 0.0
      %v677 = vsel %vm668, %v636, 0.0
      %v678 = vsel %vm669, %v635, 0.0
      %v679 = vsel %vm670, %v634, 0.0
      %v680 = vsel %vm671, %v633, 0.0
      %v681 = vsel %vm672, %v632, 0.0
      %v682 = vsel %vm673, %v631, 0.0
      %v683 = vsel %vm674, %v630, 0.0
      %v684 = vpack.c.bf16 %v675, %v675
      %v685 = vpack.c.bf16 %v676, %v676
      %v686 = vpack.c.bf16 %v677, %v677
      %v687 = vpack.c.bf16 %v678, %v678
      %v688 = vpack.c.bf16 %v679, %v679
      %v689 = vpack.c.bf16 %v680, %v680
      %v690 = vpack.c.bf16 %v681, %v681
      %v691 = vpack.c.bf16 %v682, %v682
      %v692 = vpack.c.bf16 %v683, %v683
      %693 = vst [vmem:[#allocation2 + $0x4] sm:$0xf] %v684
      %694 = vst [vmem:[#allocation2 + $0x20] sm:$0xf] %v685
      %695 = vst [vmem:[#allocation2 + $0x3c] sm:$0xf] %v686
      %696 = vst [vmem:[#allocation2 + $0x58] sm:$0xf] %v687
      %697 = vst [vmem:[#allocation2 + $0x74] sm:$0xf] %v688
      %698 = vst [vmem:[#allocation2 + $0x90] sm:$0xf] %v689
      %699 = vst [vmem:[#allocation2 + $0xac] sm:$0xf] %v690
      %700 = vst [vmem:[#allocation2 + $0xc8] sm:$0xf] %v691
      %701 = vst [vmem:[#allocation2 + $0xe4] sm:$0xf] %v692
      %v702 = vrot.slane %v213, 7
      %v703 = vrot.slane %v214, 7
      %v704 = vrot.slane %v215, 7
      %v705 = vrot.slane %v216, 7
      %v706 = vrot.slane %v217, 7
      %v707 = vrot.slane %v218, 7
      %v708 = vrot.slane %v219, 7
      %v709 = vrot.slane %v220, 7
      %v710 = vrot.slane %v221, 7
      %vm711 = vcmp.lt.s32.totalorder %v223, 1
      %v712 = vsel %vm711, %v709, %v710
      %v713 = vsel %vm711, %v708, %v709
      %v714 = vsel %vm711, %v707, %v708
      %v715 = vsel %vm711, %v706, %v707
      %v716 = vsel %vm711, %v705, %v706
      %v717 = vsel %vm711, %v704, %v705
      %v718 = vsel %vm711, %v703, %v704
      %v719 = vsel %vm711, %v702, %v703
      %v720 = vsel %vm711, %v710, %v702
      %v721 = vadd.s32 %v529, 4294967295
      %v722 = vadd.s32 %v530, 4294967295
      %v723 = vadd.s32 %v531, 4294967295
      %v724 = vadd.s32 %v532, 4294967295
      %v725 = vadd.s32 %v533, 4294967295
      %v726 = vadd.s32 %v534, 4294967295
      %v727 = vadd.s32 %v535, 4294967295
      %v728 = vadd.s32 %v536, 4294967295
      %v729 = vadd.s32 %v537, 4294967295
      %vm730 = vcmp.ge.s32.totalorder %v721, 0
      %vm731 = vcmp.ge.s32.totalorder %v722, 0
      %vm732 = vcmp.ge.s32.totalorder %v723, 0
      %vm733 = vcmp.ge.s32.totalorder %v724, 0
      %vm734 = vcmp.ge.s32.totalorder %v725, 0
      %vm735 = vcmp.ge.s32.totalorder %v726, 0
      %vm736 = vcmp.ge.s32.totalorder %v727, 0
      %vm737 = vcmp.ge.s32.totalorder %v728, 0
      %vm738 = vcmp.ge.s32.totalorder %v729, 0
      %v739 = vsel %vm730, 1, 0
      %v740 = vsel %vm731, 1, 0
      %v741 = vsel %vm732, 1, 0
      %v742 = vsel %vm733, 1, 0
      %v743 = vsel %vm734, 1, 0
      %v744 = vsel %vm735, 1, 0
      %v745 = vsel %vm736, 1, 0
      %v746 = vsel %vm737, 1, 0
      %v747 = vsel %vm738, 1, 0
      %vm748 = vcmp.eq.s32.totalorder %v739, 1
      %vm749 = vcmp.eq.s32.totalorder %v740, 1
      %vm750 = vcmp.eq.s32.totalorder %v741, 1
      %vm751 = vcmp.eq.s32.totalorder %v742, 1
      %vm752 = vcmp.eq.s32.totalorder %v743, 1
      %vm753 = vcmp.eq.s32.totalorder %v744, 1
      %vm754 = vcmp.eq.s32.totalorder %v745, 1
      %vm755 = vcmp.eq.s32.totalorder %v746, 1
      %vm756 = vcmp.eq.s32.totalorder %v747, 1
      %v757 = vsel %vm748, %v720, 0.0
      %v758 = vsel %vm749, %v719, 0.0
      %v759 = vsel %vm750, %v718, 0.0
      %v760 = vsel %vm751, %v717, 0.0
      %v761 = vsel %vm752, %v716, 0.0
      %v762 = vsel %vm753, %v715, 0.0
      %v763 = vsel %vm754, %v714, 0.0
      %v764 = vsel %vm755, %v713, 0.0
      %v765 = vsel %vm756, %v712, 0.0
      %v766 = vpack.c.bf16 %v757, %v757
      %v767 = vpack.c.bf16 %v758, %v758
      %v768 = vpack.c.bf16 %v759, %v759
      %v769 = vpack.c.bf16 %v760, %v760
      %v770 = vpack.c.bf16 %v761, %v761
      %v771 = vpack.c.bf16 %v762, %v762
      %v772 = vpack.c.bf16 %v763, %v763
      %v773 = vpack.c.bf16 %v764, %v764
      %v774 = vpack.c.bf16 %v765, %v765
      %775 = vst [vmem:[#allocation2 + $0x8] sm:$0xf] %v766
      %776 = vst [vmem:[#allocation2 + $0x24] sm:$0xf] %v767
      %777 = vst [vmem:[#allocation2 + $0x40] sm:$0xf] %v768
      %778 = vst [vmem:[#allocation2 + $0x5c] sm:$0xf] %v769
      %779 = vst [vmem:[#allocation2 + $0x78] sm:$0xf] %v770
      %780 = vst [vmem:[#allocation2 + $0x94] sm:$0xf] %v771
      %781 = vst [vmem:[#allocation2 + $0xb0] sm:$0xf] %v772
      %782 = vst [vmem:[#allocation2 + $0xcc] sm:$0xf] %v773
      %783 = vst [vmem:[#allocation2 + $0xe8] sm:$0xf] %v774
      %v784 = vpack.c.bf16 %v213, %v213
      %v785 = vpack.c.bf16 %v214, %v214
      %v786 = vpack.c.bf16 %v215, %v215
      %v787 = vpack.c.bf16 %v216, %v216
      %v788 = vpack.c.bf16 %v217, %v217
      %v789 = vpack.c.bf16 %v218, %v218
      %v790 = vpack.c.bf16 %v219, %v219
      %v791 = vpack.c.bf16 %v220, %v220
      %v792 = vpack.c.bf16 %v221, %v221
      %793 = vst [vmem:[#allocation2 + $0xc] sm:$0xf] %v784
      %794 = vst [vmem:[#allocation2 + $0x28] sm:$0xf] %v785
      %795 = vst [vmem:[#allocation2 + $0x44] sm:$0xf] %v786
      %796 = vst [vmem:[#allocation2 + $0x60] sm:$0xf] %v787
      %797 = vst [vmem:[#allocation2 + $0x7c] sm:$0xf] %v788
      %798 = vst [vmem:[#allocation2 + $0x98] sm:$0xf] %v789
      %799 = vst [vmem:[#allocation2 + $0xb4] sm:$0xf] %v790
      %800 = vst [vmem:[#allocation2 + $0xd0] sm:$0xf] %v791
      %801 = vst [vmem:[#allocation2 + $0xec] sm:$0xf] %v792
      %v802 = vrot.slane %v213, 1
      %v803 = vrot.slane %v214, 1
      %v804 = vrot.slane %v215, 1
      %v805 = vrot.slane %v216, 1
      %v806 = vrot.slane %v217, 1
      %v807 = vrot.slane %v218, 1
      %v808 = vrot.slane %v219, 1
      %v809 = vrot.slane %v220, 1
      %v810 = vrot.slane %v221, 1
      %vm811 = vcmp.lt.s32.totalorder %v223, 7
      %v812 = vsel %vm811, %v809, %v810
      %v813 = vsel %vm811, %v808, %v809
      %v814 = vsel %vm811, %v807, %v808
      %v815 = vsel %vm811, %v806, %v807
      %v816 = vsel %vm811, %v805, %v806
      %v817 = vsel %vm811, %v804, %v805
      %v818 = vsel %vm811, %v803, %v804
      %v819 = vsel %vm811, %v802, %v803
      %v820 = vsel %vm811, %v810, %v802
      %v821 = vadd.s32 %v529, 1
      %v822 = vadd.s32 %v530, 1
      %v823 = vadd.s32 %v531, 1
      %v824 = vadd.s32 %v532, 1
      %v825 = vadd.s32 %v533, 1
      %v826 = vadd.s32 %v534, 1
      %v827 = vadd.s32 %v535, 1
      %v828 = vadd.s32 %v536, 1
      %v829 = vadd.s32 %v537, 1
      %vm830 = vcmp.lt.s32.totalorder %v821, 12
      %vm831 = vcmp.lt.s32.totalorder %v822, 12
      %vm832 = vcmp.lt.s32.totalorder %v823, 12
      %vm833 = vcmp.lt.s32.totalorder %v824, 12
      %vm834 = vcmp.lt.s32.totalorder %v825, 12
      %vm835 = vcmp.lt.s32.totalorder %v826, 12
      %vm836 = vcmp.lt.s32.totalorder %v827, 12
      %vm837 = vcmp.lt.s32.totalorder %v828, 12
      %vm838 = vcmp.lt.s32.totalorder %v829, 12
      %v839 = vsel %vm830, 1, 0
      %v840 = vsel %vm831, 1, 0
      %v841 = vsel %vm832, 1, 0
      %v842 = vsel %vm833, 1, 0
      %v843 = vsel %vm834, 1, 0
      %v844 = vsel %vm835, 1, 0
      %v845 = vsel %vm836, 1, 0
      %v846 = vsel %vm837, 1, 0
      %v847 = vsel %vm838, 1, 0
      %vm848 = vcmp.eq.s32.totalorder %v839, 1
      %vm849 = vcmp.eq.s32.totalorder %v840, 1
      %vm850 = vcmp.eq.s32.totalorder %v841, 1
      %vm851 = vcmp.eq.s32.totalorder %v842, 1
      %vm852 = vcmp.eq.s32.totalorder %v843, 1
      %vm853 = vcmp.eq.s32.totalorder %v844, 1
      %vm854 = vcmp.eq.s32.totalorder %v845, 1
      %vm855 = vcmp.eq.s32.totalorder %v846, 1
      %vm856 = vcmp.eq.s32.totalorder %v847, 1
      %v857 = vsel %vm848, %v819, 0.0
      %v858 = vsel %vm849, %v818, 0.0
      %v859 = vsel %vm850, %v817, 0.0
      %v860 = vsel %vm851, %v816, 0.0
      %v861 = vsel %vm852, %v815, 0.0
      %v862 = vsel %vm853, %v814, 0.0
      %v863 = vsel %vm854, %v813, 0.0
      %v864 = vsel %vm855, %v812, 0.0
      %v865 = vsel %vm856, %v820, 0.0
      %v866 = vpack.c.bf16 %v857, %v857
      %v867 = vpack.c.bf16 %v858, %v858
      %v868 = vpack.c.bf16 %v859, %v859
      %v869 = vpack.c.bf16 %v860, %v860
      %v870 = vpack.c.bf16 %v861, %v861
      %v871 = vpack.c.bf16 %v862, %v862
      %v872 = vpack.c.bf16 %v863, %v863
      %v873 = vpack.c.bf16 %v864, %v864
      %v874 = vpack.c.bf16 %v865, %v865
      %875 = vst [vmem:[#allocation2 + $0x10] sm:$0xf] %v866
      %876 = vst [vmem:[#allocation2 + $0x2c] sm:$0xf] %v867
      %877 = vst [vmem:[#allocation2 + $0x48] sm:$0xf] %v868
      %878 = vst [vmem:[#allocation2 + $0x64] sm:$0xf] %v869
      %879 = vst [vmem:[#allocation2 + $0x80] sm:$0xf] %v870
      %880 = vst [vmem:[#allocation2 + $0x9c] sm:$0xf] %v871
      %881 = vst [vmem:[#allocation2 + $0xb8] sm:$0xf] %v872
      %882 = vst [vmem:[#allocation2 + $0xd4] sm:$0xf] %v873
      %883 = vst [vmem:[#allocation2 + $0xf0] sm:$0xf] %v874
      %v884 = vrot.slane %v213, 2
      %v885 = vrot.slane %v214, 2
      %v886 = vrot.slane %v215, 2
      %v887 = vrot.slane %v216, 2
      %v888 = vrot.slane %v217, 2
      %v889 = vrot.slane %v218, 2
      %v890 = vrot.slane %v219, 2
      %v891 = vrot.slane %v220, 2
      %v892 = vrot.slane %v221, 2
      %vm893 = vcmp.lt.s32.totalorder %v223, 6
      %v894 = vsel %vm893, %v891, %v892
      %v895 = vsel %vm893, %v890, %v891
      %v896 = vsel %vm893, %v889, %v890
      %v897 = vsel %vm893, %v888, %v889
      %v898 = vsel %vm893, %v887, %v888
      %v899 = vsel %vm893, %v886, %v887
      %v900 = vsel %vm893, %v885, %v886
      %v901 = vsel %vm893, %v884, %v885
      %v902 = vsel %vm893, %v892, %v884
      %v903 = vadd.s32 %v529, 2
      %v904 = vadd.s32 %v530, 2
      %v905 = vadd.s32 %v531, 2
      %v906 = vadd.s32 %v532, 2
      %v907 = vadd.s32 %v533, 2
      %v908 = vadd.s32 %v534, 2
      %v909 = vadd.s32 %v535, 2
      %v910 = vadd.s32 %v536, 2
      %v911 = vadd.s32 %v537, 2
      %vm912 = vcmp.lt.s32.totalorder %v903, 12
      %vm913 = vcmp.lt.s32.totalorder %v904, 12
      %vm914 = vcmp.lt.s32.totalorder %v905, 12
      %vm915 = vcmp.lt.s32.totalorder %v906, 12
      %vm916 = vcmp.lt.s32.totalorder %v907, 12
      %vm917 = vcmp.lt.s32.totalorder %v908, 12
      %vm918 = vcmp.lt.s32.totalorder %v909, 12
      %vm919 = vcmp.lt.s32.totalorder %v910, 12
      %vm920 = vcmp.lt.s32.totalorder %v911, 12
      %v921 = vsel %vm912, 1, 0
      %v922 = vsel %vm913, 1, 0
      %v923 = vsel %vm914, 1, 0
      %v924 = vsel %vm915, 1, 0
      %v925 = vsel %vm916, 1, 0
      %v926 = vsel %vm917, 1, 0
      %v927 = vsel %vm918, 1, 0
      %v928 = vsel %vm919, 1, 0
      %v929 = vsel %vm920, 1, 0
      %vm930 = vcmp.eq.s32.totalorder %v921, 1
      %vm931 = vcmp.eq.s32.totalorder %v922, 1
      %vm932 = vcmp.eq.s32.totalorder %v923, 1
      %vm933 = vcmp.eq.s32.totalorder %v924, 1
      %vm934 = vcmp.eq.s32.totalorder %v925, 1
      %vm935 = vcmp.eq.s32.totalorder %v926, 1
      %vm936 = vcmp.eq.s32.totalorder %v927, 1
      %vm937 = vcmp.eq.s32.totalorder %v928, 1
      %vm938 = vcmp.eq.s32.totalorder %v929, 1
      %v939 = vsel %vm930, %v901, 0.0
      %v940 = vsel %vm931, %v900, 0.0
      %v941 = vsel %vm932, %v899, 0.0
      %v942 = vsel %vm933, %v898, 0.0
      %v943 = vsel %vm934, %v897, 0.0
      %v944 = vsel %vm935, %v896, 0.0
      %v945 = vsel %vm936, %v895, 0.0
      %v946 = vsel %vm937, %v894, 0.0
      %v947 = vsel %vm938, %v902, 0.0
      %v948 = vpack.c.bf16 %v939, %v939
      %v949 = vpack.c.bf16 %v940, %v940
      %v950 = vpack.c.bf16 %v941, %v941
      %v951 = vpack.c.bf16 %v942, %v942
      %v952 = vpack.c.bf16 %v943, %v943
      %v953 = vpack.c.bf16 %v944, %v944
      %v954 = vpack.c.bf16 %v945, %v945
      %v955 = vpack.c.bf16 %v946, %v946
      %v956 = vpack.c.bf16 %v947, %v947
      %957 = vst [vmem:[#allocation2 + $0x14] sm:$0xf] %v948
      %958 = vst [vmem:[#allocation2 + $0x30] sm:$0xf] %v949
      %959 = vst [vmem:[#allocation2 + $0x4c] sm:$0xf] %v950
      %960 = vst [vmem:[#allocation2 + $0x68] sm:$0xf] %v951
      %961 = vst [vmem:[#allocation2 + $0x84] sm:$0xf] %v952
      %962 = vst [vmem:[#allocation2 + $0xa0] sm:$0xf] %v953
      %963 = vst [vmem:[#allocation2 + $0xbc] sm:$0xf] %v954
      %964 = vst [vmem:[#allocation2 + $0xd8] sm:$0xf] %v955
      %965 = vst [vmem:[#allocation2 + $0xf4] sm:$0xf] %v956
      %v966 = vrot.slane %v213, 3
      %v967 = vrot.slane %v214, 3
      %v968 = vrot.slane %v215, 3
      %v969 = vrot.slane %v216, 3
      %v970 = vrot.slane %v217, 3
      %v971 = vrot.slane %v218, 3
      %v972 = vrot.slane %v219, 3
      %v973 = vrot.slane %v220, 3
      %v974 = vrot.slane %v221, 3
      %vm975 = vcmp.lt.s32.totalorder %v223, 5
      %v976 = vsel %vm975, %v973, %v974
      %v977 = vsel %vm975, %v972, %v973
      %v978 = vsel %vm975, %v971, %v972
      %v979 = vsel %vm975, %v970, %v971
      %v980 = vsel %vm975, %v969, %v970
      %v981 = vsel %vm975, %v968, %v969
      %v982 = vsel %vm975, %v967, %v968
      %v983 = vsel %vm975, %v966, %v967
      %v984 = vsel %vm975, %v974, %v966
      %v985 = vadd.s32 %v529, 3
      %v986 = vadd.s32 %v530, 3
      %v987 = vadd.s32 %v531, 3
      %v988 = vadd.s32 %v532, 3
      %v989 = vadd.s32 %v533, 3
      %v990 = vadd.s32 %v534, 3
      %v991 = vadd.s32 %v535, 3
      %v992 = vadd.s32 %v536, 3
      %v993 = vadd.s32 %v537, 3
      %vm994 = vcmp.lt.s32.totalorder %v985, 12
      %vm995 = vcmp.lt.s32.totalorder %v986, 12
      %vm996 = vcmp.lt.s32.totalorder %v987, 12
      %vm997 = vcmp.lt.s32.totalorder %v988, 12
      %vm998 = vcmp.lt.s32.totalorder %v989, 12
      %vm999 = vcmp.lt.s32.totalorder %v990, 12
      %vm1000 = vcmp.lt.s32.totalorder %v991, 12
      %vm1001 = vcmp.lt.s32.totalorder %v992, 12
      %vm1002 = vcmp.lt.s32.totalorder %v993, 12
      %v1003 = vsel %vm994, 1, 0
      %v1004 = vsel %vm995, 1, 0
      %v1005 = vsel %vm996, 1, 0
      %v1006 = vsel %vm997, 1, 0
      %v1007 = vsel %vm998, 1, 0
      %v1008 = vsel %vm999, 1, 0
      %v1009 = vsel %vm1000, 1, 0
      %v1010 = vsel %vm1001, 1, 0
      %v1011 = vsel %vm1002, 1, 0
      %vm1012 = vcmp.eq.s32.totalorder %v1003, 1
      %vm1013 = vcmp.eq.s32.totalorder %v1004, 1
      %vm1014 = vcmp.eq.s32.totalorder %v1005, 1
      %vm1015 = vcmp.eq.s32.totalorder %v1006, 1
      %vm1016 = vcmp.eq.s32.totalorder %v1007, 1
      %vm1017 = vcmp.eq.s32.totalorder %v1008, 1
      %vm1018 = vcmp.eq.s32.totalorder %v1009, 1
      %vm1019 = vcmp.eq.s32.totalorder %v1010, 1
      %vm1020 = vcmp.eq.s32.totalorder %v1011, 1
      %v1021 = vsel %vm1012, %v983, 0.0
      %v1022 = vsel %vm1013, %v982, 0.0
      %v1023 = vsel %vm1014, %v981, 0.0
      %v1024 = vsel %vm1015, %v980, 0.0
      %v1025 = vsel %vm1016, %v979, 0.0
      %v1026 = vsel %vm1017, %v978, 0.0
      %v1027 = vsel %vm1018, %v977, 0.0
      %v1028 = vsel %vm1019, %v976, 0.0
      %v1029 = vsel %vm1020, %v984, 0.0
      %v1030 = vpack.c.bf16 %v1021, %v1021
      %v1031 = vpack.c.bf16 %v1022, %v1022
      %v1032 = vpack.c.bf16 %v1023, %v1023
      %v1033 = vpack.c.bf16 %v1024, %v1024
      %v1034 = vpack.c.bf16 %v1025, %v1025
      %v1035 = vpack.c.bf16 %v1026, %v1026
      %v1036 = vpack.c.bf16 %v1027, %v1027
      %v1037 = vpack.c.bf16 %v1028, %v1028
      %v1038 = vpack.c.bf16 %v1029, %v1029
      %1039 = vst [vmem:[#allocation2 + $0x18] sm:$0xf] %v1030
      %1040 = vst [vmem:[#allocation2 + $0x34] sm:$0xf] %v1031
      %1041 = vst [vmem:[#allocation2 + $0x50] sm:$0xf] %v1032
      %1042 = vst [vmem:[#allocation2 + $0x6c] sm:$0xf] %v1033
      %1043 = vst [vmem:[#allocation2 + $0x88] sm:$0xf] %v1034
      %1044 = vst [vmem:[#allocation2 + $0xa4] sm:$0xf] %v1035
      %1045 = vst [vmem:[#allocation2 + $0xc0] sm:$0xf] %v1036
      %1046 = vst [vmem:[#allocation2 + $0xdc] sm:$0xf] %v1037
      %1047 = vst [vmem:[#allocation2 + $0xf8] sm:$0xf] %v1038
      %v1048 = vld [vmem:[#allocation2] sm:$0xff]
      %v1049 = vld [vmem:[#allocation2 + $0x8] sm:$0xff]
      %v1050 = vld [vmem:[#allocation2 + $0x10] sm:$0xff]
      %v1051 = vld [vmem:[#allocation2 + $0x18] sm:$0xf]
      %v1052 = vld [vmem:[#allocation2 + $0x1c] sm:$0xff]
      %v1053 = vld [vmem:[#allocation2 + $0x24] sm:$0xff]
      %v1054 = vld [vmem:[#allocation2 + $0x2c] sm:$0xff]
      %v1055 = vld [vmem:[#allocation2 + $0x34] sm:$0xf]
      %v1056 = vld [vmem:[#allocation2 + $0x38] sm:$0xff]
      %v1057 = vld [vmem:[#allocation2 + $0x40] sm:$0xff]
      %v1058 = vld [vmem:[#allocation2 + $0x48] sm:$0xff]
      %v1059 = vld [vmem:[#allocation2 + $0x50] sm:$0xf]
      %v1060 = vld [vmem:[#allocation2 + $0x54] sm:$0xff]
      %v1061 = vld [vmem:[#allocation2 + $0x5c] sm:$0xff]
      %v1062 = vld [vmem:[#allocation2 + $0x64] sm:$0xff]
      %v1063 = vld [vmem:[#allocation2 + $0x6c] sm:$0xf]
      %v1064 = vld [vmem:[#allocation2 + $0x70] sm:$0xff]
      %v1065 = vld [vmem:[#allocation2 + $0x78] sm:$0xff]
      %v1066 = vld [vmem:[#allocation2 + $0x80] sm:$0xff]
      %v1067 = vld [vmem:[#allocation2 + $0x88] sm:$0xf]
      %v1068 = vld [vmem:[#allocation2 + $0x8c] sm:$0xff]
      %v1069 = vld [vmem:[#allocation2 + $0x94] sm:$0xff]
      %v1070 = vld [vmem:[#allocation2 + $0x9c] sm:$0xff]
      %v1071 = vld [vmem:[#allocation2 + $0xa4] sm:$0xf]
      %v1072 = vld [vmem:[#allocation2 + $0xa8] sm:$0xff]
      %v1073 = vld [vmem:[#allocation2 + $0xb0] sm:$0xff]
      %v1074 = vld [vmem:[#allocation2 + $0xb8] sm:$0xff]
      %v1075 = vld [vmem:[#allocation2 + $0xc0] sm:$0xf]
      %v1076 = vld [vmem:[#allocation2 + $0xc4] sm:$0xff]
      %v1077 = vld [vmem:[#allocation2 + $0xcc] sm:$0xff]
      %v1078 = vld [vmem:[#allocation2 + $0xd4] sm:$0xff]
      %v1079 = vld [vmem:[#allocation2 + $0xdc] sm:$0xf]
      %v1080 = vld [vmem:[#allocation2 + $0xe0] sm:$0xff]
      %v1081 = vld [vmem:[#allocation2 + $0xe8] sm:$0xff]
      %v1082 = vld [vmem:[#allocation2 + $0xf0] sm:$0xff]
      %v1083 = vld [vmem:[#allocation2 + $0xf8] sm:$0xf]
      %v1084 = vld [vmem:[%s1] sm:$0xf]
      %v1085 = vld [vmem:[%s1 + $0x4] sm:$0xf]
      %v1086 = vld [vmem:[%s1 + $0x8] sm:$0xf]
      %v1087 = vld [vmem:[%s1 + $0xc] sm:$0xf]
      %v1088 = vld [vmem:[%s1 + $0x10] sm:$0xf]
      %v1089 = vld [vmem:[%s1 + $0x14] sm:$0xf]
      %v1090 = vld [vmem:[%s1 + $0x18] sm:$0xf]
      %v1091 = vld [vmem:[%s1 + $0x1c] sm:$0xf]
      %v1092 = vld [vmem:[%s1 + $0x20] sm:$0xf]
      %v1093 = vld [vmem:[%s1 + $0x24] sm:$0xf]
      %v1094 = vld [vmem:[%s1 + $0x28] sm:$0xf]
      %v1095 = vld [vmem:[%s1 + $0x2c] sm:$0xf]
      %v1096 = vld [vmem:[%s1 + $0x30] sm:$0xf]
      %v1097 = vld [vmem:[%s1 + $0x34] sm:$0xf]
      %v1098 = vld [vmem:[%s1 + $0x38] sm:$0xf]
      %v1099 = vld [vmem:[%s1 + $0x3c] sm:$0xf]
      %v1100 = vld [vmem:[%s1 + $0x40] sm:$0xf]
      %v1101 = vld [vmem:[%s1 + $0x44] sm:$0xf]
      %v1102 = vld [vmem:[%s1 + $0x48] sm:$0xf]
      %v1103 = vld [vmem:[%s1 + $0x4c] sm:$0xf]
      %v1104 = vld [vmem:[%s1 + $0x50] sm:$0xf]
      %v1105 = vld [vmem:[%s1 + $0x54] sm:$0xf]
      %v1106 = vld [vmem:[%s1 + $0x58] sm:$0xf]
      %v1107 = vld [vmem:[%s1 + $0x5c] sm:$0xf]
      %v1108 = vld [vmem:[%s1 + $0x60] sm:$0xf]
      %v1109 = vld [vmem:[%s1 + $0x64] sm:$0xf]
      %v1110 = vld [vmem:[%s1 + $0x68] sm:$0xf]
      %v1111 = vld [vmem:[%s1 + $0x6c] sm:$0xf]
      %v1112 = vld [vmem:[%s1 + $0x70] sm:$0xf]
      %v1113 = vld [vmem:[%s1 + $0x74] sm:$0xf]
      %v1114 = vld [vmem:[%s1 + $0x78] sm:$0xf]
      %v1115 = vld [vmem:[%s1 + $0x7c] sm:$0xf]
      %v1116 = vld [vmem:[%s1 + $0x80] sm:$0xf]
      %v1117 = vld [vmem:[%s1 + $0x84] sm:$0xf]
      %v1118 = vld [vmem:[%s1 + $0x88] sm:$0xf]
      %v1119 = vld [vmem:[%s1 + $0x8c] sm:$0xf]
      %v1120 = vld [vmem:[%s1 + $0x90] sm:$0xf]
      %v1121 = vld [vmem:[%s1 + $0x94] sm:$0xf]
      %v1122 = vld [vmem:[%s1 + $0x98] sm:$0xf]
      %v1123 = vld [vmem:[%s1 + $0x9c] sm:$0xf]
      %v1124 = vld [vmem:[%s1 + $0xa0] sm:$0xf]
      %v1125 = vld [vmem:[%s1 + $0xa4] sm:$0xf]
      %v1126 = vld [vmem:[%s1 + $0xa8] sm:$0xf]
      %v1127 = vld [vmem:[%s1 + $0xac] sm:$0xf]
      %v1128 = vld [vmem:[%s1 + $0xb0] sm:$0xf]
      %v1129 = vld [vmem:[%s1 + $0xb4] sm:$0xf]
      %v1130 = vld [vmem:[%s1 + $0xb8] sm:$0xf]
      %v1131 = vld [vmem:[%s1 + $0xbc] sm:$0xf]
      %v1132 = vld [vmem:[%s1 + $0xc0] sm:$0xf]
      %v1133 = vld [vmem:[%s1 + $0xc4] sm:$0xf]
      %v1134 = vld [vmem:[%s1 + $0xc8] sm:$0xf]
      %v1135 = vld [vmem:[%s1 + $0xcc] sm:$0xf]
      %v1136 = vld [vmem:[%s1 + $0xd0] sm:$0xf]
      %v1137 = vld [vmem:[%s1 + $0xd4] sm:$0xf]
      %v1138 = vld [vmem:[%s1 + $0xd8] sm:$0xf]
      %v1139 = vld [vmem:[%s1 + $0xdc] sm:$0xf]
      %v1140 = vld [vmem:[%s1 + $0xe0] sm:$0xf]
      %v1141 = vld [vmem:[%s1 + $0xe4] sm:$0xf]
      %v1142 = vld [vmem:[%s1 + $0xe8] sm:$0xf]
      %v1143 = vld [vmem:[%s1 + $0xec] sm:$0xf]
      %v1144 = vld [vmem:[%s1 + $0xf0] sm:$0xf]
      %v1145 = vld [vmem:[%s1 + $0xf4] sm:$0xf]
      %v1146 = vld [vmem:[%s1 + $0xf8] sm:$0xf]
      %v1147 = vld [vmem:[%s1 + $0xfc] sm:$0xf]
      %v1148 = vld [vmem:[%s1 + $0x100] sm:$0xf]
      %v1149 = vld [vmem:[%s1 + $0x104] sm:$0xf]
      %v1150 = vld [vmem:[%s1 + $0x108] sm:$0xf]
      %v1151 = vld [vmem:[%s1 + $0x10c] sm:$0xf]
      %v1152 = vld [vmem:[%s1 + $0x110] sm:$0xf]
      %v1153 = vld [vmem:[%s1 + $0x114] sm:$0xf]
      %v1154 = vld [vmem:[%s1 + $0x118] sm:$0xf]
      %v1155 = vld [vmem:[%s1 + $0x11c] sm:$0xf]
      %v1156 = vld [vmem:[%s1 + $0x120] sm:$0xf]
      %v1157 = vld [vmem:[%s1 + $0x124] sm:$0xf]
      %v1158 = vld [vmem:[%s1 + $0x128] sm:$0xf]
      %v1159 = vld [vmem:[%s1 + $0x12c] sm:$0xf]
      %v1160 = vld [vmem:[%s1 + $0x130] sm:$0xf]
      %v1161 = vld [vmem:[%s1 + $0x134] sm:$0xf]
      %v1162 = vld [vmem:[%s1 + $0x138] sm:$0xf]
      %v1163 = vld [vmem:[%s1 + $0x13c] sm:$0xf]
      %v1164 = vld [vmem:[%s1 + $0x140] sm:$0xf]
      %v1165 = vld [vmem:[%s1 + $0x144] sm:$0xf]
      %v1166 = vld [vmem:[%s1 + $0x148] sm:$0xf]
      %v1167 = vld [vmem:[%s1 + $0x14c] sm:$0xf]
      %v1168 = vld [vmem:[%s1 + $0x150] sm:$0xf]
      %v1169 = vld [vmem:[%s1 + $0x154] sm:$0xf]
      %v1170 = vld [vmem:[%s1 + $0x158] sm:$0xf]
      %v1171 = vld [vmem:[%s1 + $0x15c] sm:$0xf]
      %v1172 = vld [vmem:[%s1 + $0x160] sm:$0xf]
      %v1173 = vld [vmem:[%s1 + $0x164] sm:$0xf]
      %v1174 = vld [vmem:[%s1 + $0x168] sm:$0xf]
      %v1175 = vld [vmem:[%s1 + $0x16c] sm:$0xf]
      %v1176 = vld [vmem:[%s1 + $0x170] sm:$0xf]
      %v1177 = vld [vmem:[%s1 + $0x174] sm:$0xf]
      %v1178 = vld [vmem:[%s1 + $0x178] sm:$0xf]
      %v1179 = vld [vmem:[%s1 + $0x17c] sm:$0xf]
      %v1180 = vld [vmem:[%s1 + $0x180] sm:$0xf]
      %v1181 = vld [vmem:[%s1 + $0x184] sm:$0xf]
      %v1182 = vld [vmem:[%s1 + $0x188] sm:$0xf]
      %v1183 = vld [vmem:[%s1 + $0x18c] sm:$0xf]
      %v1184 = vld [vmem:[%s1 + $0x190] sm:$0xf]
      %v1185 = vld [vmem:[%s1 + $0x194] sm:$0xf]
      %v1186 = vld [vmem:[%s1 + $0x198] sm:$0xf]
      %v1187 = vld [vmem:[%s1 + $0x19c] sm:$0xf]
      %v1188 = vld [vmem:[%s1 + $0x1a0] sm:$0xf]
      %v1189 = vld [vmem:[%s1 + $0x1a4] sm:$0xf]
      %v1190 = vld [vmem:[%s1 + $0x1a8] sm:$0xf]
      %v1191 = vld [vmem:[%s1 + $0x1ac] sm:$0xf]
      %v1192 = vld [vmem:[%s1 + $0x1b0] sm:$0xf]
      %v1193 = vld [vmem:[%s1 + $0x1b4] sm:$0xf]
      %v1194 = vld [vmem:[%s1 + $0x1b8] sm:$0xf]
      %v1195 = vld [vmem:[%s1 + $0x1bc] sm:$0xf]
      %v1196 = vperm.slane %v174, 2
      %v1233 = vunpack.c.l.b16 %v1048
      %v1234 = vunpack.c.h.b16 %v1048
      %v1235 = vunpack.c.l.b16 %v1049
      %v1236 = vunpack.c.h.b16 %v1049
      %v1237 = vunpack.c.l.b16 %v1050
      %v1238 = vunpack.c.h.b16 %v1050
      %v1239 = vunpack.c.l.b16 %v1051
      %v1240 = vunpack.c.l.b16 %v1052
      %v1241 = vunpack.c.h.b16 %v1052
      %v1242 = vunpack.c.l.b16 %v1053
      %v1243 = vunpack.c.h.b16 %v1053
      %v1244 = vunpack.c.l.b16 %v1054
      %v1245 = vunpack.c.h.b16 %v1054
      %v1246 = vunpack.c.l.b16 %v1055
      %v1247 = vunpack.c.l.b16 %v1056
      %v1248 = vunpack.c.h.b16 %v1056
      %v1249 = vunpack.c.l.b16 %v1057
      %v1250 = vunpack.c.h.b16 %v1057
      %v1251 = vunpack.c.l.b16 %v1058
      %v1252 = vunpack.c.h.b16 %v1058
      %v1253 = vunpack.c.l.b16 %v1059
      %v1254 = vunpack.c.l.b16 %v1060
      %v1255 = vunpack.c.h.b16 %v1060
      %v1256 = vunpack.c.l.b16 %v1061
      %v1257 = vunpack.c.h.b16 %v1061
      %v1258 = vunpack.c.l.b16 %v1062
      %v1259 = vunpack.c.h.b16 %v1062
      %v1260 = vunpack.c.l.b16 %v1063
      %v1261 = vunpack.c.l.b16 %v1064
      %v1262 = vunpack.c.h.b16 %v1064
      %v1263 = vunpack.c.l.b16 %v1065
      %v1264 = vunpack.c.h.b16 %v1065
      %v1265 = vunpack.c.l.b16 %v1066
      %v1266 = vunpack.c.h.b16 %v1066
      %v1267 = vunpack.c.l.b16 %v1067
      %v1268 = vunpack.c.l.b16 %v1068
      %v1269 = vunpack.c.h.b16 %v1068
      %v1270 = vunpack.c.l.b16 %v1069
      %v1271 = vunpack.c.h.b16 %v1069
      %v1272 = vunpack.c.l.b16 %v1070
      %v1273 = vunpack.c.h.b16 %v1070
      %v1274 = vunpack.c.l.b16 %v1071
      %v1275 = vunpack.c.l.b16 %v1072
      %v1276 = vunpack.c.h.b16 %v1072
      %v1277 = vunpack.c.l.b16 %v1073
      %v1278 = vunpack.c.h.b16 %v1073
      %v1279 = vunpack.c.l.b16 %v1074
      %v1280 = vunpack.c.h.b16 %v1074
      %v1281 = vunpack.c.l.b16 %v1075
      %v1282 = vunpack.c.l.b16 %v1076
      %v1283 = vunpack.c.h.b16 %v1076
      %v1284 = vunpack.c.l.b16 %v1077
      %v1285 = vunpack.c.h.b16 %v1077
      %v1286 = vunpack.c.l.b16 %v1078
      %v1287 = vunpack.c.h.b16 %v1078
      %v1288 = vunpack.c.l.b16 %v1079
      %v1289 = vunpack.c.l.b16 %v1080
      %v1290 = vunpack.c.h.b16 %v1080
      %v1291 = vunpack.c.l.b16 %v1081
      %v1292 = vunpack.c.h.b16 %v1081
      %v1293 = vunpack.c.l.b16 %v1082
      %v1294 = vunpack.c.h.b16 %v1082
      %v1295 = vunpack.c.l.b16 %v1083
      %v1296 = vpack.c.b16 %v1240, %v1233
      %v1297 = vpack.c.b16 %v1241, %v1234
      %v1298 = vpack.c.b16 %v1242, %v1235
      %v1299 = vpack.c.b16 %v1243, %v1236
      %v1300 = vpack.c.b16 %v1244, %v1237
      %v1301 = vpack.c.b16 %v1245, %v1238
      %v1302 = vpack.c.b16 %v1246, %v1239
      %v1303 = vpack.c.b16 %v1254, %v1247
      %v1304 = vpack.c.b16 %v1255, %v1248
      %v1305 = vpack.c.b16 %v1256, %v1249
      %v1306 = vpack.c.b16 %v1257, %v1250
      %v1307 = vpack.c.b16 %v1258, %v1251
      %v1308 = vpack.c.b16 %v1259, %v1252
      %v1309 = vpack.c.b16 %v1260, %v1253
      %v1310 = vpack.c.b16 %v1268, %v1261
      %v1311 = vpack.c.b16 %v1269, %v1262
      %v1312 = vpack.c.b16 %v1270, %v1263
      %v1313 = vpack.c.b16 %v1271, %v1264
      %v1314 = vpack.c.b16 %v1272, %v1265
      %v1315 = vpack.c.b16 %v1273, %v1266
      %v1316 = vpack.c.b16 %v1274, %v1267
      %v1317 = vpack.c.b16 %v1282, %v1275
      %v1318 = vpack.c.b16 %v1283, %v1276
      %v1319 = vpack.c.b16 %v1284, %v1277
      %v1320 = vpack.c.b16 %v1285, %v1278
      %v1321 = vpack.c.b16 %v1286, %v1279
      %v1322 = vpack.c.b16 %v1287, %v1280
      %v1323 = vpack.c.b16 %v1288, %v1281
      %v1324 = vpack.c.b16 %v1289, %v1289
      %v1325 = vpack.c.b16 %v1290, %v1290
      %v1326 = vpack.c.b16 %v1291, %v1291
      %v1327 = vpack.c.b16 %v1292, %v1292
      %v1328 = vpack.c.b16 %v1293, %v1293
      %v1329 = vpack.c.b16 %v1294, %v1294
      %v1330 = vpack.c.b16 %v1295, %v1295
      %v1478 = vunpack.c.l.b16 %v1084
      %v1479 = vunpack.c.l.b16 %v1085
      %v1480 = vunpack.c.l.b16 %v1086
      %v1481 = vunpack.c.l.b16 %v1087
      %v1482 = vunpack.c.l.b16 %v1088
      %v1483 = vunpack.c.l.b16 %v1089
      %v1484 = vunpack.c.l.b16 %v1090
      %v1485 = vunpack.c.l.b16 %v1091
      %v1486 = vunpack.c.l.b16 %v1092
      %v1487 = vunpack.c.l.b16 %v1093
      %v1488 = vunpack.c.l.b16 %v1094
      %v1489 = vunpack.c.l.b16 %v1095
      %v1490 = vunpack.c.l.b16 %v1096
      %v1491 = vunpack.c.l.b16 %v1097
      %v1492 = vunpack.c.l.b16 %v1098
      %v1493 = vunpack.c.l.b16 %v1099
      %v1494 = vunpack.c.l.b16 %v1100
      %v1495 = vunpack.c.l.b16 %v1101
      %v1496 = vunpack.c.l.b16 %v1102
      %v1497 = vunpack.c.l.b16 %v1103
      %v1498 = vunpack.c.l.b16 %v1104
      %v1499 = vunpack.c.l.b16 %v1105
      %v1500 = vunpack.c.l.b16 %v1106
      %v1501 = vunpack.c.l.b16 %v1107
      %v1502 = vunpack.c.l.b16 %v1108
      %v1503 = vunpack.c.l.b16 %v1109
      %v1504 = vunpack.c.l.b16 %v1110
      %v1505 = vunpack.c.l.b16 %v1111
      %v1506 = vunpack.c.l.b16 %v1112
      %v1507 = vunpack.c.l.b16 %v1113
      %v1508 = vunpack.c.l.b16 %v1114
      %v1509 = vunpack.c.l.b16 %v1115
      %v1510 = vunpack.c.l.b16 %v1116
      %v1511 = vunpack.c.l.b16 %v1117
      %v1512 = vunpack.c.l.b16 %v1118
      %v1513 = vunpack.c.l.b16 %v1119
      %v1514 = vunpack.c.l.b16 %v1120
      %v1515 = vunpack.c.l.b16 %v1121
      %v1516 = vunpack.c.l.b16 %v1122
      %v1517 = vunpack.c.l.b16 %v1123
      %v1518 = vunpack.c.l.b16 %v1124
      %v1519 = vunpack.c.l.b16 %v1125
      %v1520 = vunpack.c.l.b16 %v1126
      %v1521 = vunpack.c.l.b16 %v1127
      %v1522 = vunpack.c.l.b16 %v1128
      %v1523 = vunpack.c.l.b16 %v1129
      %v1524 = vunpack.c.l.b16 %v1130
      %v1525 = vunpack.c.l.b16 %v1131
      %v1526 = vunpack.c.l.b16 %v1132
      %v1527 = vunpack.c.l.b16 %v1133
      %v1528 = vunpack.c.l.b16 %v1134
      %v1529 = vunpack.c.l.b16 %v1135
      %v1530 = vunpack.c.l.b16 %v1136
      %v1531 = vunpack.c.l.b16 %v1137
      %v1532 = vunpack.c.l.b16 %v1138
      %v1533 = vunpack.c.l.b16 %v1139
      %v1534 = vunpack.c.l.b16 %v1140
      %v1535 = vunpack.c.l.b16 %v1141
      %v1536 = vunpack.c.l.b16 %v1142
      %v1537 = vunpack.c.l.b16 %v1143
      %v1538 = vunpack.c.l.b16 %v1144
      %v1539 = vunpack.c.l.b16 %v1145
      %v1540 = vunpack.c.l.b16 %v1146
      %v1541 = vunpack.c.l.b16 %v1147
      %v1542 = vunpack.c.l.b16 %v1148
      %v1543 = vunpack.c.l.b16 %v1149
      %v1544 = vunpack.c.l.b16 %v1150
      %v1545 = vunpack.c.l.b16 %v1151
      %v1546 = vunpack.c.l.b16 %v1152
      %v1547 = vunpack.c.l.b16 %v1153
      %v1548 = vunpack.c.l.b16 %v1154
      %v1549 = vunpack.c.l.b16 %v1155
      %v1550 = vunpack.c.l.b16 %v1156
      %v1551 = vunpack.c.l.b16 %v1157
      %v1552 = vunpack.c.l.b16 %v1158
      %v1553 = vunpack.c.l.b16 %v1159
      %v1554 = vunpack.c.l.b16 %v1160
      %v1555 = vunpack.c.l.b16 %v1161
      %v1556 = vunpack.c.l.b16 %v1162
      %v1557 = vunpack.c.l.b16 %v1163
      %v1558 = vunpack.c.l.b16 %v1164
      %v1559 = vunpack.c.l.b16 %v1165
      %v1560 = vunpack.c.l.b16 %v1166
      %v1561 = vunpack.c.l.b16 %v1167
      %v1562 = vunpack.c.l.b16 %v1168
      %v1563 = vunpack.c.l.b16 %v1169
      %v1564 = vunpack.c.l.b16 %v1170
      %v1565 = vunpack.c.l.b16 %v1171
      %v1566 = vunpack.c.l.b16 %v1172
      %v1567 = vunpack.c.l.b16 %v1173
      %v1568 = vunpack.c.l.b16 %v1174
      %v1569 = vunpack.c.l.b16 %v1175
      %v1570 = vunpack.c.l.b16 %v1176
      %v1571 = vunpack.c.l.b16 %v1177
      %v1572 = vunpack.c.l.b16 %v1178
      %v1573 = vunpack.c.l.b16 %v1179
      %v1574 = vunpack.c.l.b16 %v1180
      %v1575 = vunpack.c.l.b16 %v1181
      %v1576 = vunpack.c.l.b16 %v1182
      %v1577 = vunpack.c.l.b16 %v1183
      %v1578 = vunpack.c.l.b16 %v1184
      %v1579 = vunpack.c.l.b16 %v1185
      %v1580 = vunpack.c.l.b16 %v1186
      %v1581 = vunpack.c.l.b16 %v1187
      %v1582 = vunpack.c.l.b16 %v1188
      %v1583 = vunpack.c.l.b16 %v1189
      %v1584 = vunpack.c.l.b16 %v1190
      %v1585 = vunpack.c.l.b16 %v1191
      %v1586 = vunpack.c.l.b16 %v1192
      %v1587 = vunpack.c.l.b16 %v1193
      %v1588 = vunpack.c.l.b16 %v1194
      %v1589 = vunpack.c.l.b16 %v1195
      %v1590 = vpack.c.b16 %v1479, %v1478
      %v1591 = vpack.c.b16 %v1481, %v1480
      %v1592 = vpack.c.b16 %v1483, %v1482
      %v1593 = vpack.c.b16 %v1485, %v1484
      %v1594 = vpack.c.b16 %v1487, %v1486
      %v1595 = vpack.c.b16 %v1489, %v1488
      %v1596 = vpack.c.b16 %v1491, %v1490
      %v1597 = vpack.c.b16 %v1493, %v1492
      %v1598 = vpack.c.b16 %v1495, %v1494
      %v1599 = vpack.c.b16 %v1497, %v1496
      %v1600 = vpack.c.b16 %v1499, %v1498
      %v1601 = vpack.c.b16 %v1501, %v1500
      %v1602 = vpack.c.b16 %v1503, %v1502
      %v1603 = vpack.c.b16 %v1505, %v1504
      %v1604 = vpack.c.b16 %v1507, %v1506
      %v1605 = vpack.c.b16 %v1509, %v1508
      %v1606 = vpack.c.b16 %v1511, %v1510
      %v1607 = vpack.c.b16 %v1513, %v1512
      %v1608 = vpack.c.b16 %v1515, %v1514
      %v1609 = vpack.c.b16 %v1517, %v1516
      %v1610 = vpack.c.b16 %v1519, %v1518
      %v1611 = vpack.c.b16 %v1521, %v1520
      %v1612 = vpack.c.b16 %v1523, %v1522
      %v1613 = vpack.c.b16 %v1525, %v1524
      %v1614 = vpack.c.b16 %v1527, %v1526
      %v1615 = vpack.c.b16 %v1529, %v1528
      %v1616 = vpack.c.b16 %v1531, %v1530
      %v1617 = vpack.c.b16 %v1533, %v1532
      %v1618 = vpack.c.b16 %v1535, %v1534
      %v1619 = vpack.c.b16 %v1537, %v1536
      %v1620 = vpack.c.b16 %v1539, %v1538
      %v1621 = vpack.c.b16 %v1541, %v1540
      %v1622 = vpack.c.b16 %v1543, %v1542
      %v1623 = vpack.c.b16 %v1545, %v1544
      %v1624 = vpack.c.b16 %v1547, %v1546
      %v1625 = vpack.c.b16 %v1549, %v1548
      %v1626 = vpack.c.b16 %v1551, %v1550
      %v1627 = vpack.c.b16 %v1553, %v1552
      %v1628 = vpack.c.b16 %v1555, %v1554
      %v1629 = vpack.c.b16 %v1557, %v1556
      %v1630 = vpack.c.b16 %v1559, %v1558
      %v1631 = vpack.c.b16 %v1561, %v1560
      %v1632 = vpack.c.b16 %v1563, %v1562
      %v1633 = vpack.c.b16 %v1565, %v1564
      %v1634 = vpack.c.b16 %v1567, %v1566
      %v1635 = vpack.c.b16 %v1569, %v1568
      %v1636 = vpack.c.b16 %v1571, %v1570
      %v1637 = vpack.c.b16 %v1573, %v1572
      %v1638 = vpack.c.b16 %v1575, %v1574
      %v1639 = vpack.c.b16 %v1577, %v1576
      %v1640 = vpack.c.b16 %v1579, %v1578
      %v1641 = vpack.c.b16 %v1581, %v1580
      %v1642 = vpack.c.b16 %v1583, %v1582
      %v1643 = vpack.c.b16 %v1585, %v1584
      %v1644 = vpack.c.b16 %v1587, %v1586
      %v1645 = vpack.c.b16 %v1589, %v1588
      %1702 = vmatpush.bf16.msra.mxu0 %v1597
      %1703 = vmatpush.bf16.msra.mxu0 %v1596
      %1704 = vmatpush.bf16.msra.mxu0 %v1595
      %1705 = vmatpush.bf16.msra.mxu0 %v1594
      %1706 = vmatpush.bf16.msra.mxu0 %v1593
      %1707 = vmatpush.bf16.msra.mxu0 %v1592
      %1708 = vmatpush.bf16.msra.mxu0 %v1591
      %1709 = vmatpush.bf16.msra.mxu0 %v1590
      %1710 = vmatmul.bf16.gmra.mxu0 %v1296
      %v1711 = vpop.f32.mrf.mxu0
      %v1712 = vadd.f32 %v1196, %v1711
      %v1713 = vpop.f32.mrf.mxu0
      %v1714 = vadd.f32 %v1196, %v1713
      %1715 = vmatmul.bf16.gmra.mxu0 %v1303
      %v1716 = vpop.f32.mrf.mxu0
      %v1717 = vadd.f32 %v1196, %v1716
      %v1718 = vpop.f32.mrf.mxu0
      %v1719 = vadd.f32 %v1196, %v1718
      %1720 = vmatmul.bf16.gmra.mxu0 %v1310
      %v1721 = vpop.f32.mrf.mxu0
      %v1722 = vadd.f32 %v1196, %v1721
      %v1723 = vpop.f32.mrf.mxu0
      %v1724 = vadd.f32 %v1196, %v1723
      %1725 = vmatmul.bf16.gmra.mxu0 %v1317
      %v1726 = vpop.f32.mrf.mxu0
      %v1727 = vadd.f32 %v1196, %v1726
      %v1728 = vpop.f32.mrf.mxu0
      %v1729 = vadd.f32 %v1196, %v1728
      %1730 = vmatmul.bf16.gmra.mxu0 %v1324
      %v1731 = vpop.f32.mrf.mxu0
      %v1732 = vadd.f32 %v1196, %v1731
      %v1733 = vpop.f32.mrf.mxu0
      %1734 = vdwg.mxu0
      %1735 = vmatpush.bf16.msra.mxu0 %v1605
      %1736 = vmatpush.bf16.msra.mxu0 %v1604
      %1737 = vmatpush.bf16.msra.mxu0 %v1603
      %1738 = vmatpush.bf16.msra.mxu0 %v1602
      %1739 = vmatpush.bf16.msra.mxu0 %v1601
      %1740 = vmatpush.bf16.msra.mxu0 %v1600
      %1741 = vmatpush.bf16.msra.mxu0 %v1599
      %1742 = vmatpush.bf16.msra.mxu0 %v1598
      %1743 = vmatmul.bf16.gmra.mxu0 %v1297
      %v1744 = vpop.f32.mrf.mxu0
      %v1745 = vadd.f32 %v1712, %v1744
      %v1746 = vpop.f32.mrf.mxu0
      %v1747 = vadd.f32 %v1714, %v1746
      %1748 = vmatmul.bf16.gmra.mxu0 %v1304
      %v1749 = vpop.f32.mrf.mxu0
      %v1750 = vadd.f32 %v1717, %v1749
      %v1751 = vpop.f32.mrf.mxu0
      %v1752 = vadd.f32 %v1719, %v1751
      %1753 = vmatmul.bf16.gmra.mxu0 %v1311
      %v1754 = vpop.f32.mrf.mxu0
      %v1755 = vadd.f32 %v1722, %v1754
      %v1756 = vpop.f32.mrf.mxu0
      %v1757 = vadd.f32 %v1724, %v1756
      %1758 = vmatmul.bf16.gmra.mxu0 %v1318
      %v1759 = vpop.f32.mrf.mxu0
      %v1760 = vadd.f32 %v1727, %v1759
      %v1761 = vpop.f32.mrf.mxu0
      %v1762 = vadd.f32 %v1729, %v1761
      %1763 = vmatmul.bf16.gmra.mxu0 %v1325
      %v1764 = vpop.f32.mrf.mxu0
      %v1765 = vadd.f32 %v1732, %v1764
      %v1766 = vpop.f32.mrf.mxu0
      %1767 = vdwg.mxu0
      %1768 = vmatpush.bf16.msra.mxu0 %v1613
      %1769 = vmatpush.bf16.msra.mxu0 %v1612
      %1770 = vmatpush.bf16.msra.mxu0 %v1611
      %1771 = vmatpush.bf16.msra.mxu0 %v1610
      %1772 = vmatpush.bf16.msra.mxu0 %v1609
      %1773 = vmatpush.bf16.msra.mxu0 %v1608
      %1774 = vmatpush.bf16.msra.mxu0 %v1607
      %1775 = vmatpush.bf16.msra.mxu0 %v1606
      %1776 = vmatmul.bf16.gmra.mxu0 %v1298
      %v1777 = vpop.f32.mrf.mxu0
      %v1778 = vadd.f32 %v1745, %v1777
      %v1779 = vpop.f32.mrf.mxu0
      %v1780 = vadd.f32 %v1747, %v1779
      %1781 = vmatmul.bf16.gmra.mxu0 %v1305
      %v1782 = vpop.f32.mrf.mxu0
      %v1783 = vadd.f32 %v1750, %v1782
      %v1784 = vpop.f32.mrf.mxu0
      %v1785 = vadd.f32 %v1752, %v1784
      %1786 = vmatmul.bf16.gmra.mxu0 %v1312
      %v1787 = vpop.f32.mrf.mxu0
      %v1788 = vadd.f32 %v1755, %v1787
      %v1789 = vpop.f32.mrf.mxu0
      %v1790 = vadd.f32 %v1757, %v1789
      %1791 = vmatmul.bf16.gmra.mxu0 %v1319
      %v1792 = vpop.f32.mrf.mxu0
      %v1793 = vadd.f32 %v1760, %v1792
      %v1794 = vpop.f32.mrf.mxu0
      %v1795 = vadd.f32 %v1762, %v1794
      %1796 = vmatmul.bf16.gmra.mxu0 %v1326
      %v1797 = vpop.f32.mrf.mxu0
      %v1798 = vadd.f32 %v1765, %v1797
      %v1799 = vpop.f32.mrf.mxu0
      %1800 = vdwg.mxu0
      %1801 = vmatpush.bf16.msra.mxu0 %v1621
      %1802 = vmatpush.bf16.msra.mxu0 %v1620
      %1803 = vmatpush.bf16.msra.mxu0 %v1619
      %1804 = vmatpush.bf16.msra.mxu0 %v1618
      %1805 = vmatpush.bf16.msra.mxu0 %v1617
      %1806 = vmatpush.bf16.msra.mxu0 %v1616
      %1807 = vmatpush.bf16.msra.mxu0 %v1615
      %1808 = vmatpush.bf16.msra.mxu0 %v1614
      %1809 = vmatmul.bf16.gmra.mxu0 %v1299
      %v1810 = vpop.f32.mrf.mxu0
      %v1811 = vadd.f32 %v1778, %v1810
      %v1812 = vpop.f32.mrf.mxu0
      %v1813 = vadd.f32 %v1780, %v1812
      %1814 = vmatmul.bf16.gmra.mxu0 %v1306
      %v1815 = vpop.f32.mrf.mxu0
      %v1816 = vadd.f32 %v1783, %v1815
      %v1817 = vpop.f32.mrf.mxu0
      %v1818 = vadd.f32 %v1785, %v1817
      %1819 = vmatmul.bf16.gmra.mxu0 %v1313
      %v1820 = vpop.f32.mrf.mxu0
      %v1821 = vadd.f32 %v1788, %v1820
      %v1822 = vpop.f32.mrf.mxu0
      %v1823 = vadd.f32 %v1790, %v1822
      %1824 = vmatmul.bf16.gmra.mxu0 %v1320
      %v1825 = vpop.f32.mrf.mxu0
      %v1826 = vadd.f32 %v1793, %v1825
      %v1827 = vpop.f32.mrf.mxu0
      %v1828 = vadd.f32 %v1795, %v1827
      %1829 = vmatmul.bf16.gmra.mxu0 %v1327
      %v1830 = vpop.f32.mrf.mxu0
      %v1831 = vadd.f32 %v1798, %v1830
      %v1832 = vpop.f32.mrf.mxu0
      %1833 = vdwg.mxu0
      %1834 = vmatpush.bf16.msra.mxu0 %v1629
      %1835 = vmatpush.bf16.msra.mxu0 %v1628
      %1836 = vmatpush.bf16.msra.mxu0 %v1627
      %1837 = vmatpush.bf16.msra.mxu0 %v1626
      %1838 = vmatpush.bf16.msra.mxu0 %v1625
      %1839 = vmatpush.bf16.msra.mxu0 %v1624
      %1840 = vmatpush.bf16.msra.mxu0 %v1623
      %1841 = vmatpush.bf16.msra.mxu0 %v1622
      %1842 = vmatmul.bf16.gmra.mxu0 %v1300
      %v1843 = vpop.f32.mrf.mxu0
      %v1844 = vadd.f32 %v1811, %v1843
      %v1845 = vpop.f32.mrf.mxu0
      %v1846 = vadd.f32 %v1813, %v1845
      %1847 = vmatmul.bf16.gmra.mxu0 %v1307
      %v1848 = vpop.f32.mrf.mxu0
      %v1849 = vadd.f32 %v1816, %v1848
      %v1850 = vpop.f32.mrf.mxu0
      %v1851 = vadd.f32 %v1818, %v1850
      %1852 = vmatmul.bf16.gmra.mxu0 %v1314
      %v1853 = vpop.f32.mrf.mxu0
      %v1854 = vadd.f32 %v1821, %v1853
      %v1855 = vpop.f32.mrf.mxu0
      %v1856 = vadd.f32 %v1823, %v1855
      %1857 = vmatmul.bf16.gmra.mxu0 %v1321
      %v1858 = vpop.f32.mrf.mxu0
      %v1859 = vadd.f32 %v1826, %v1858
      %v1860 = vpop.f32.mrf.mxu0
      %v1861 = vadd.f32 %v1828, %v1860
      %1862 = vmatmul.bf16.gmra.mxu0 %v1328
      %v1863 = vpop.f32.mrf.mxu0
      %v1864 = vadd.f32 %v1831, %v1863
      %v1865 = vpop.f32.mrf.mxu0
      %1866 = vdwg.mxu0
      %1867 = vmatpush.bf16.msra.mxu0 %v1637
      %1868 = vmatpush.bf16.msra.mxu0 %v1636
      %1869 = vmatpush.bf16.msra.mxu0 %v1635
      %1870 = vmatpush.bf16.msra.mxu0 %v1634
      %1871 = vmatpush.bf16.msra.mxu0 %v1633
      %1872 = vmatpush.bf16.msra.mxu0 %v1632
      %1873 = vmatpush.bf16.msra.mxu0 %v1631
      %1874 = vmatpush.bf16.msra.mxu0 %v1630
      %1875 = vmatmul.bf16.gmra.mxu0 %v1301
      %v1876 = vpop.f32.mrf.mxu0
      %v1877 = vadd.f32 %v1844, %v1876
      %v1878 = vpop.f32.mrf.mxu0
      %v1879 = vadd.f32 %v1846, %v1878
      %1880 = vmatmul.bf16.gmra.mxu0 %v1308
      %v1881 = vpop.f32.mrf.mxu0
      %v1882 = vadd.f32 %v1849, %v1881
      %v1883 = vpop.f32.mrf.mxu0
      %v1884 = vadd.f32 %v1851, %v1883
      %1885 = vmatmul.bf16.gmra.mxu0 %v1315
      %v1886 = vpop.f32.mrf.mxu0
      %v1887 = vadd.f32 %v1854, %v1886
      %v1888 = vpop.f32.mrf.mxu0
      %v1889 = vadd.f32 %v1856, %v1888
      %1890 = vmatmul.bf16.gmra.mxu0 %v1322
      %v1891 = vpop.f32.mrf.mxu0
      %v1892 = vadd.f32 %v1859, %v1891
      %v1893 = vpop.f32.mrf.mxu0
      %v1894 = vadd.f32 %v1861, %v1893
      %1895 = vmatmul.bf16.gmra.mxu0 %v1329
      %v1896 = vpop.f32.mrf.mxu0
      %v1897 = vadd.f32 %v1864, %v1896
      %v1898 = vpop.f32.mrf.mxu0
      %1899 = vdwg.mxu0
      %1900 = vmatpush.bf16.msra.mxu0 %v1645
      %1901 = vmatpush.bf16.msra.mxu0 %v1644
      %1902 = vmatpush.bf16.msra.mxu0 %v1643
      %1903 = vmatpush.bf16.msra.mxu0 %v1642
      %1904 = vmatpush.bf16.msra.mxu0 %v1641
      %1905 = vmatpush.bf16.msra.mxu0 %v1640
      %1906 = vmatpush.bf16.msra.mxu0 %v1639
      %1907 = vmatpush.bf16.msra.mxu0 %v1638
      %1908 = vmatmul.bf16.gmra.mxu0 %v1302
      %v1909 = vpop.f32.mrf.mxu0
      %v1910 = vadd.f32 %v1877, %v1909
      %v1911 = vpop.f32.mrf.mxu0
      %v1912 = vadd.f32 %v1879, %v1911
      %1913 = vmatmul.bf16.gmra.mxu0 %v1309
      %v1914 = vpop.f32.mrf.mxu0
      %v1915 = vadd.f32 %v1882, %v1914
      %v1916 = vpop.f32.mrf.mxu0
      %v1917 = vadd.f32 %v1884, %v1916
      %1918 = vmatmul.bf16.gmra.mxu0 %v1316
      %v1919 = vpop.f32.mrf.mxu0
      %v1920 = vadd.f32 %v1887, %v1919
      %v1921 = vpop.f32.mrf.mxu0
      %v1922 = vadd.f32 %v1889, %v1921
      %1923 = vmatmul.bf16.gmra.mxu0 %v1323
      %v1924 = vpop.f32.mrf.mxu0
      %v1925 = vadd.f32 %v1892, %v1924
      %v1926 = vpop.f32.mrf.mxu0
      %v1927 = vadd.f32 %v1894, %v1926
      %1928 = vmatmul.bf16.gmra.mxu0 %v1330
      %v1929 = vpop.f32.mrf.mxu0
      %v1930 = vadd.f32 %v1897, %v1929
      %v1931 = vpop.f32.mrf.mxu0
      %1932 = vdwg.mxu0
      %1933 = vst [vmem:[%s172] sm:$0xff] %v1910
      %1934 = vst [vmem:[%s172 + $0x8] sm:$0xff] %v1912
      %1935 = vst [vmem:[%s172 + $0x10] sm:$0xff] %v1915
      %1936 = vst [vmem:[%s172 + $0x18] sm:$0xff] %v1917
      %1937 = vst [vmem:[%s172 + $0x20] sm:$0xff] %v1920
      %1938 = vst [vmem:[%s172 + $0x28] sm:$0xff] %v1922
      %1939 = vst [vmem:[%s172 + $0x30] sm:$0xff] %v1925
      %1940 = vst [vmem:[%s172 + $0x38] sm:$0xff] %v1927
      %1941 = vst [vmem:[%s172 + $0x40] sm:$0xff] %v1930
      %s1942 = smul.u32 9, %s14
      %p1943 = scmp.lt.s32.totalorder %s1942, 17
      %s1944 = scalar_select %p1943, %s1942, 17
      %s1945 = smul.addr %s1944, 8
      %s1946 = scalar_lea.vmem %s3, %s1945
      // Predicated region
      $region33: #{bn_relu_conv_bn.1} parent=31 // pred_check
        %p1947 = pneg %p100
      $region34: #{bn_relu_conv_bn.1} parent=31 // pred_check_branch
        %1949 = sbr.rel (%p1947) target = $region36
      $region35: #{bn_relu_conv_bn.1} parent=31 // pred_region
        %s1950 = smul.u32 9, %s14
      $region36: #{bn_relu_conv_bn.1} parent=31 // pred_fallthru
        _
    $region32: #{bn_relu_conv_bn.1} parent=5 // pred_fallthru
      _
    %p1951 = scmp.le.s32.totalorder 2, %s9
    // Predicated region
    $region37: #{bn_relu_conv_bn.1} parent=5 // pred_check
      %p1952 = pneg %p1951
    $region38: #{bn_relu_conv_bn.1} parent=5 // pred_check_branch
      %1954 = sbr.rel (%p1952) target = $region40
    $region39: #{bn_relu_conv_bn.1} parent=5 // pred_region
      %s1955 = ssub.s32 %s9, 2
      // Predicated region
      $region41: #{bn_relu_conv_bn.1} parent=39 // pred_check
        %p1956 = pneg %p106
      $region42: #{bn_relu_conv_bn.1} parent=39 // pred_check_branch
        %1958 = sbr.rel (%p1956) target = $region44
      $region43: #{bn_relu_conv_bn.1} parent=39 // pred_region
        %s1959 = smul.u32 9, %s15
        %p1960 = scmp.lt.s32.totalorder %s1959, 17
        %s1961 = scalar_select %p1960, %s1959, 17
        %s1962 = smul.addr %s1961, 8
        %s1963 = scalar_lea.vmem %s3, %s1962
      $region44: #{bn_relu_conv_bn.1} parent=39 // pred_fallthru
        _
    $region40: #{bn_relu_conv_bn.1} parent=5 // pred_fallthru
      _
  $region6: #{bn_relu_conv_bn.1} parent=0 // loop_footer
    %s13 = sadd.s32 1, %s9
  $region7: #{bn_relu_conv_bn.1} parent=0 // loop_footer_branch
    %8 = sbr.rel target = $region3
  $region8: #{bn_relu_conv_bn.1} parent=0 // loop_exit
    _

</llo_original>
